<compile_context>
chip_gen: v6e
topology: v6e:2x2x1
jax: 0.10.0
libtpu: 0.0.40
codegen_flags: <defaults>
</compile_context>

<pallas_src>
import jax
import jax.numpy as jnp
from jax.experimental import pallas as pl
from jax.experimental.pallas import tpu as pltpu

# Logical (PyTorch) layer dims and lane-padded counterparts.
DIMS        = [(784, 400), (400, 200), (200, 100), (100, 10)]
P_HID       = [512, 256, 128]    # 400, 200, 100 padded to 128 multiples
P_OUT       = 128                # 10 classes padded
NUM_CLASSES = 10
NEG_INF     = -1e30


def _round_up(n, m):
    return (n + m - 1) // m * m


def fcnet_kernel(x_ref, w1_ref, b1_ref, w2_ref, b2_ref, w3_ref, b3_ref,
                 w4_ref, b4_ref, out_ref):
    """Fused forward for one batch tile: 4 bf16 matmuls (f32 acc) + ReLU + log_softmax."""
    x = x_ref[...]                                                       # (TB, 784) bf16

    h = jnp.dot(x, w1_ref[...], preferred_element_type=jnp.float32)     # (TB, 512) f32
    h = jnp.maximum(h + b1_ref[...], 0.0).astype(jnp.bfloat16)

    h = jnp.dot(h, w2_ref[...], preferred_element_type=jnp.float32)     # (TB, 256) f32
    h = jnp.maximum(h + b2_ref[...], 0.0).astype(jnp.bfloat16)

    h = jnp.dot(h, w3_ref[...], preferred_element_type=jnp.float32)     # (TB, 128) f32
    h = jnp.maximum(h + b3_ref[...], 0.0).astype(jnp.bfloat16)

    # Padded class columns of w4 are zero and the corresponding b4 lanes hold -1e30,
    # so the padded logits are -1e30 with no extra masking ops needed here.
    logits = jnp.dot(h, w4_ref[...], preferred_element_type=jnp.float32) + b4_ref[...]

    # log_softmax over the class axis (dim=1 in the PyTorch module), all in f32.
    m = jnp.max(logits, axis=-1, keepdims=True)
    shifted = logits - m
    lse = jnp.log(jnp.sum(jnp.exp(shifted), axis=-1, keepdims=True))
    out_ref[...] = shifted - lse


def prepare_params(params):
    """One-time preparation (hoist out of the forward and reuse across calls):
    zero-pad every weight/bias to lane-padded dims, cast matmul weights to bf16,
    and bake the class mask into b4's padded lanes (-1e30)."""
    ins  = [784] + P_HID           # input dim of each layer (x is NOT K-padded)
    outs = P_HID + [P_OUT]         # padded output dim of each layer
    prepared = []
    last = len(params) - 1
    for li, ((w, b), pin, pout) in enumerate(zip(params, ins, outs)):
        fin, fout = w.shape
        wp = jnp.zeros((pin, pout), jnp.float32).at[:fin, :fout].set(w)
        if li == last:
            bp = jnp.full((1, pout), NEG_INF, jnp.float32)
        else:
            bp = jnp.zeros((1, pout), jnp.float32)
        bp = bp.at[:, :fout].set(b.reshape(1, -1))
        prepared.append((wp.astype(jnp.bfloat16), bp))   # bias stays f32
    return prepared


def _choose_batch_tile(B, batch_tile):
    """Tile rounded to 16 (bf16 sublanes). Small batches shrink the tile; large
    batches cap it so the grid keeps >= 2 steps (v7x has 2 TensorCores)."""
    B16 = _round_up(B, 16)
    if B16 <= batch_tile:
        tb = B16
    else:
        tb = batch_tile
        half = _round_up((B16 + 1) // 2, 16)
        if half < tb:
            tb = max(256, half)
    Bp = _round_up(B, tb)
    return tb, Bp


def fcnet_forward(x, prepared, *, batch_tile=1024):
    """x: (B, 1, 28, 28) or (B, 784). `prepared` comes from prepare_params.
    Returns (B, 10) float32 log-probabilities."""
    x = x.reshape(-1, 784).astype(jnp.float32)     # same as torch's x.view(-1, 784)
    B = x.shape[0]

    tb, Bp = _choose_batch_tile(B, batch_tile)

    # Pad only the batch dim; K stays at 784 (block dim equal to the full array dim).
    xp = jnp.zeros((Bp, 784), jnp.float32).at[:B].set(x).astype(jnp.bfloat16)

    (w1, b1), (w2, b2), (w3, b3), (w4, b4) = prepared

    def resident_spec(arr):
        # Full-array block with a constant index_map -> resident in VMEM across steps.
        nd = arr.ndim
        return pl.BlockSpec(arr.shape, lambda i, _nd=nd: (0,) * _nd)

    grid = (Bp // tb,)
    out = pl.pallas_call(
        fcnet_kernel,
        out_shape=jax.ShapeDtypeStruct((Bp, P_OUT), jnp.float32),
        grid_spec=pltpu.PrefetchScalarGridSpec(
            num_scalar_prefetch=0,
            grid=grid,
            in_specs=[
                # Streaming x tile. If an xprof trace shows the x DMA exposed at the
                # top of each step, add pipeline_mode=pl.Buffered(3) here.
                pl.BlockSpec((tb, 784), lambda i: (i, 0)),
                resident_spec(w1), resident_spec(b1),
                resident_spec(w2), resident_spec(b2),
                resident_spec(w3), resident_spec(b3),
                resident_spec(w4), resident_spec(b4),
            ],
            out_specs=pl.BlockSpec((tb, P_OUT), lambda i: (i, 0)),
        ),
        compiler_params=pltpu.CompilerParams(
            dimension_semantics=("parallel",),
            vmem_limit_bytes=48 * 1024 * 1024),
    )(xp, w1, b1, w2, b2, w3, b3, w4, b4)

    return out[:B, :NUM_CLASSES]


def init_params(key):
    """Deterministic init mirroring nn.Linear's U(-1/sqrt(fan_in), 1/sqrt(fan_in)).
    Weights are created directly in (in, out) layout; biases as (1, out)."""
    params = []
    for (fan_in, fan_out) in DIMS:
        key, kw, kb = jax.random.split(key, 3)
        bound = 1.0 / jnp.sqrt(jnp.float32(fan_in))
        w = jax.random.uniform(kw, (fan_in, fan_out), jnp.float32, -bound, bound)
        b = jax.random.uniform(kb, (1, fan_out), jnp.float32, -bound, bound)
        params.append((w, b))
    return params


def fcnet_reference_f32(x, params):
    """Pure-f32 JAX reference (matches the PyTorch module exactly)."""
    x = x.reshape(-1, 784).astype(jnp.float32)
    (w1, b1), (w2, b2), (w3, b3), (w4, b4) = params
    h = jax.nn.relu(x @ w1 + b1)
    h = jax.nn.relu(h @ w2 + b2)
    h = jax.nn.relu(h @ w3 + b3)
    logits = h @ w4 + b4
    return jax.nn.log_softmax(logits, axis=1)


def fcnet_reference_bf16(x, params):
    """Reference mirroring the kernel's numerics: bf16 matmul operands, f32 accumulation."""
    def layer(h, w, b, relu):
        y = jnp.dot(h, w.astype(jnp.bfloat16),
                    preferred_element_type=jnp.float32) + b.reshape(1, -1)
        if relu:
            y = jnp.maximum(y, 0.0).astype(jnp.bfloat16)
        return y

    x = x.reshape(-1, 784).astype(jnp.bfloat16)
    (w1, b1), (w2, b2), (w3, b3), (w4, b4) = params
    h = layer(x, w1, b1, True)
    h = layer(h, w2, b2, True)
    h = layer(h, w3, b3, True)
    logits = layer(h, w4, b4, False)
    return jax.nn.log_softmax(logits, axis=1)


if __name__ == "__main__":
    key = jax.random.PRNGKey(0)
    key, kx = jax.random.split(key)

    B = 32
    # MNIST-style NCHW input, flattened inside the wrapper (x.view(-1, 784)).
    x = jax.random.normal(kx, (B, 1, 28, 28), dtype=jnp.float32)
    params = init_params(key)

    # Pad/cast/mask the parameters once and reuse for every forward call.
    prepared = prepare_params(params)

    out = fcnet_forward(x, prepared)
    out = jax.block_until_ready(out)
    assert out.shape == (B, 10), out.shape

    # Tight check against a reference with matching bf16-matmul numerics.
    ref_matched = fcnet_reference_bf16(x, params)
    assert jnp.allclose(out, ref_matched, atol=2e-3, rtol=2e-3), \
        f"max abs err vs bf16-matched ref: {jnp.max(jnp.abs(out - ref_matched))}"

    # Loose sanity check against the pure-f32 PyTorch-equivalent reference.
    ref_f32 = fcnet_reference_f32(x, params)
    assert jnp.allclose(out, ref_f32, atol=5e-2, rtol=5e-2), \
        f"max abs err vs f32 ref: {jnp.max(jnp.abs(out - ref_f32))}"

    print("KERNEL_OK")
</pallas_src>

<mosaic_0001>
module attributes {stable_mosaic.version = 11 : i64} {
  func.func @fcnet_kernel(%arg0: i32, %arg1: memref<32x784xbf16, #tpu.memory_space<vmem>>, %arg2: memref<784x512xbf16, #tpu.memory_space<vmem>>, %arg3: memref<1x512xf32, #tpu.memory_space<vmem>>, %arg4: memref<512x256xbf16, #tpu.memory_space<vmem>>, %arg5: memref<1x256xf32, #tpu.memory_space<vmem>>, %arg6: memref<256x128xbf16, #tpu.memory_space<vmem>>, %arg7: memref<1x128xf32, #tpu.memory_space<vmem>>, %arg8: memref<128x128xbf16, #tpu.memory_space<vmem>>, %arg9: memref<1x128xf32, #tpu.memory_space<vmem>>, %arg10: memref<32x128xf32, #tpu.memory_space<vmem>>) attributes {dimension_semantics = [#tpu.dimension_semantics<parallel>], iteration_bounds = array<i64: 1>, scalar_prefetch = 0 : i64, scratch_operands = 0 : i64, tpu.core_type = #tpu.core_type<tc>, window_params = [{transform_indices = @transform_0, window_bounds = array<i64: 32, 784>}, {pipeline_mode = #tpu.pipeline_mode<synchronous>, transform_indices = @transform_1, window_bounds = array<i64: 784, 512>}, {pipeline_mode = #tpu.pipeline_mode<synchronous>, transform_indices = @transform_2, window_bounds = array<i64: 1, 512>}, {pipeline_mode = #tpu.pipeline_mode<synchronous>, transform_indices = @transform_3, window_bounds = array<i64: 512, 256>}, {pipeline_mode = #tpu.pipeline_mode<synchronous>, transform_indices = @transform_4, window_bounds = array<i64: 1, 256>}, {pipeline_mode = #tpu.pipeline_mode<synchronous>, transform_indices = @transform_5, window_bounds = array<i64: 256, 128>}, {pipeline_mode = #tpu.pipeline_mode<synchronous>, transform_indices = @transform_6, window_bounds = array<i64: 1, 128>}, {pipeline_mode = #tpu.pipeline_mode<synchronous>, transform_indices = @transform_7, window_bounds = array<i64: 128, 128>}, {pipeline_mode = #tpu.pipeline_mode<synchronous>, transform_indices = @transform_8, window_bounds = array<i64: 1, 128>}, {transform_indices = @transform_9, window_bounds = array<i64: 32, 128>}]} {
    %c0 = arith.constant 0 : index
    %c0_0 = arith.constant 0 : index
    %0 = vector.load %arg1[%c0, %c0_0] : memref<32x784xbf16, #tpu.memory_space<vmem>>, vector<32x784xbf16>
    %c0_1 = arith.constant 0 : index
    %c0_2 = arith.constant 0 : index
    %1 = vector.load %arg2[%c0_1, %c0_2] : memref<784x512xbf16, #tpu.memory_space<vmem>>, vector<784x512xbf16>
    %cst = arith.constant dense<0.000000e+00> : vector<32x512xf32>
    %2 = tpu.matmul %0, %1, %cst {dimension_numbers = #tpu.dot_dimension_numbers<[1], [0], [0], [1], [0, 0, 1, 1], [], []>} : vector<32x784xbf16>, vector<784x512xbf16>, vector<32x512xf32> -> vector<32x512xf32>
    %c0_3 = arith.constant 0 : index
    %c0_4 = arith.constant 0 : index
    %3 = vector.load %arg3[%c0_3, %c0_4] : memref<1x512xf32, #tpu.memory_space<vmem>>, vector<1x512xf32>
    %4 = vector.broadcast %3 : vector<1x512xf32> to vector<32x512xf32>
    %5 = arith.addf %2, %4 : vector<32x512xf32>
    %cst_5 = arith.constant 0.000000e+00 : f32
    %6 = vector.broadcast %cst_5 : f32 to vector<32x512xf32>
    %7 = arith.maximumf %5, %6 : vector<32x512xf32>
    %8 = arith.truncf %7 : vector<32x512xf32> to vector<32x512xbf16>
    %c0_6 = arith.constant 0 : index
    %c0_7 = arith.constant 0 : index
    %9 = vector.load %arg4[%c0_6, %c0_7] : memref<512x256xbf16, #tpu.memory_space<vmem>>, vector<512x256xbf16>
    %cst_8 = arith.constant dense<0.000000e+00> : vector<32x256xf32>
    %10 = tpu.matmul %8, %9, %cst_8 {dimension_numbers = #tpu.dot_dimension_numbers<[1], [0], [0], [1], [0, 0, 1, 1], [], []>} : vector<32x512xbf16>, vector<512x256xbf16>, vector<32x256xf32> -> vector<32x256xf32>
    %c0_9 = arith.constant 0 : index
    %c0_10 = arith.constant 0 : index
    %11 = vector.load %arg5[%c0_9, %c0_10] : memref<1x256xf32, #tpu.memory_space<vmem>>, vector<1x256xf32>
    %12 = vector.broadcast %11 : vector<1x256xf32> to vector<32x256xf32>
    %13 = arith.addf %10, %12 : vector<32x256xf32>
    %cst_11 = arith.constant 0.000000e+00 : f32
    %14 = vector.broadcast %cst_11 : f32 to vector<32x256xf32>
    %15 = arith.maximumf %13, %14 : vector<32x256xf32>
    %16 = arith.truncf %15 : vector<32x256xf32> to vector<32x256xbf16>
    %c0_12 = arith.constant 0 : index
    %c0_13 = arith.constant 0 : index
    %17 = vector.load %arg6[%c0_12, %c0_13] : memref<256x128xbf16, #tpu.memory_space<vmem>>, vector<256x128xbf16>
    %cst_14 = arith.constant dense<0.000000e+00> : vector<32x128xf32>
    %18 = tpu.matmul %16, %17, %cst_14 {dimension_numbers = #tpu.dot_dimension_numbers<[1], [0], [0], [1], [0, 0, 1, 1], [], []>} : vector<32x256xbf16>, vector<256x128xbf16>, vector<32x128xf32> -> vector<32x128xf32>
    %c0_15 = arith.constant 0 : index
    %c0_16 = arith.constant 0 : index
    %19 = vector.load %arg7[%c0_15, %c0_16] : memref<1x128xf32, #tpu.memory_space<vmem>>, vector<1x128xf32>
    %20 = vector.broadcast %19 : vector<1x128xf32> to vector<32x128xf32>
    %21 = arith.addf %18, %20 : vector<32x128xf32>
    %cst_17 = arith.constant 0.000000e+00 : f32
    %22 = vector.broadcast %cst_17 : f32 to vector<32x128xf32>
    %23 = arith.maximumf %21, %22 : vector<32x128xf32>
    %24 = arith.truncf %23 : vector<32x128xf32> to vector<32x128xbf16>
    %c0_18 = arith.constant 0 : index
    %c0_19 = arith.constant 0 : index
    %25 = vector.load %arg8[%c0_18, %c0_19] : memref<128x128xbf16, #tpu.memory_space<vmem>>, vector<128x128xbf16>
    %cst_20 = arith.constant dense<0.000000e+00> : vector<32x128xf32>
    %26 = tpu.matmul %24, %25, %cst_20 {dimension_numbers = #tpu.dot_dimension_numbers<[1], [0], [0], [1], [0, 0, 1, 1], [], []>} : vector<32x128xbf16>, vector<128x128xbf16>, vector<32x128xf32> -> vector<32x128xf32>
    %c0_21 = arith.constant 0 : index
    %c0_22 = arith.constant 0 : index
    %27 = vector.load %arg9[%c0_21, %c0_22] : memref<1x128xf32, #tpu.memory_space<vmem>>, vector<1x128xf32>
    %28 = vector.broadcast %27 : vector<1x128xf32> to vector<32x128xf32>
    %29 = arith.addf %26, %28 : vector<32x128xf32>
    %cst_23 = arith.constant dense<0xFF800000> : vector<32xf32>
    %30 = vector.multi_reduction <maximumf>, %29, %cst_23 [1] : vector<32x128xf32> to vector<32xf32>
    %31 = vector.shape_cast %30 : vector<32xf32> to vector<32x1xf32>
    %32 = vector.broadcast %31 : vector<32x1xf32> to vector<32x128xf32>
    %33 = arith.subf %29, %32 : vector<32x128xf32>
    %34 = math.exp %33 : vector<32x128xf32>
    %cst_24 = arith.constant dense<0.000000e+00> : vector<32xf32>
    %35 = vector.multi_reduction <add>, %34, %cst_24 [1] : vector<32x128xf32> to vector<32xf32>
    %36 = vector.shape_cast %35 : vector<32xf32> to vector<32x1xf32>
    %37 = math.log %36 : vector<32x1xf32>
    %38 = vector.broadcast %37 : vector<32x1xf32> to vector<32x128xf32>
    %39 = arith.subf %33, %38 : vector<32x128xf32>
    %c0_25 = arith.constant 0 : index
    %c0_26 = arith.constant 0 : index
    %40 = vector.load %arg10[%c0_25, %c0_26] : memref<32x128xf32, #tpu.memory_space<vmem>>, vector<32x128xf32>
    tpu.vector_store %arg10[%c0_25, %c0_26], %39 {strides = array<i32>} : memref<32x128xf32, #tpu.memory_space<vmem>>, vector<32x128xf32>,
    return
  }
  func.func @transform_0(%arg0: i32) -> (i32, i32) {
    %c0_i32 = arith.constant 0 : i32
    %c0_i32_0 = arith.constant 0 : i32
    return %arg0, %c0_i32 : i32, i32
  }
  func.func @transform_1(%arg0: i32) -> (i32, i32) {
    %c0_i32 = arith.constant 0 : i32
    %c0_i32_0 = arith.constant 0 : i32
    %c0_i32_1 = arith.constant 0 : i32
    return %c0_i32, %c0_i32_0 : i32, i32
  }
  func.func @transform_2(%arg0: i32) -> (i32, i32) {
    %c0_i32 = arith.constant 0 : i32
    %c0_i32_0 = arith.constant 0 : i32
    %c0_i32_1 = arith.constant 0 : i32
    return %c0_i32, %c0_i32_0 : i32, i32
  }
  func.func @transform_3(%arg0: i32) -> (i32, i32) {
    %c0_i32 = arith.constant 0 : i32
    %c0_i32_0 = arith.constant 0 : i32
    %c0_i32_1 = arith.constant 0 : i32
    return %c0_i32, %c0_i32_0 : i32, i32
  }
  func.func @transform_4(%arg0: i32) -> (i32, i32) {
    %c0_i32 = arith.constant 0 : i32
    %c0_i32_0 = arith.constant 0 : i32
    %c0_i32_1 = arith.constant 0 : i32
    return %c0_i32, %c0_i32_0 : i32, i32
  }
  func.func @transform_5(%arg0: i32) -> (i32, i32) {
    %c0_i32 = arith.constant 0 : i32
    %c0_i32_0 = arith.constant 0 : i32
    %c0_i32_1 = arith.constant 0 : i32
    return %c0_i32, %c0_i32_0 : i32, i32
  }
  func.func @transform_6(%arg0: i32) -> (i32, i32) {
    %c0_i32 = arith.constant 0 : i32
    %c0_i32_0 = arith.constant 0 : i32
    %c0_i32_1 = arith.constant 0 : i32
    return %c0_i32, %c0_i32_0 : i32, i32
  }
  func.func @transform_7(%arg0: i32) -> (i32, i32) {
    %c0_i32 = arith.constant 0 : i32
    %c0_i32_0 = arith.constant 0 : i32
    %c0_i32_1 = arith.constant 0 : i32
    return %c0_i32, %c0_i32_0 : i32, i32
  }
  func.func @transform_8(%arg0: i32) -> (i32, i32) {
    %c0_i32 = arith.constant 0 : i32
    %c0_i32_0 = arith.constant 0 : i32
    %c0_i32_1 = arith.constant 0 : i32
    return %c0_i32, %c0_i32_0 : i32, i32
  }
  func.func @transform_9(%arg0: i32) -> (i32, i32) {
    %c0_i32 = arith.constant 0 : i32
    %c0_i32_0 = arith.constant 0 : i32
    return %arg0, %c0_i32 : i32, i32
  }
}

</mosaic_0001>

<llo_original>
// kernel: tpu_custom_call.1
$region0: #{tpu_custom_call.1}
  #allocation0 [shape = 'u32[]', space=smem, size = 0x4, offset = 0x4, fixed_abs, tag = 'smem constant byte address 0x4 - core index']
  #allocation1 [shape = 'u32[144,128]{1,0:T(1,128)}', space=vmem, size = 0x12000, scoped, tag = 'internal scratch']
  %s0 = inlined_call_operand.hbm [shape: bf16[32,784], index: 0, kind: input, shape index: {}]
  %s1 = inlined_call_operand.hbm [shape: bf16[784,512], index: 1, kind: input, shape index: {}]
  %s2 = inlined_call_operand.hbm [shape: f32[1,512], index: 2, kind: input, shape index: {}]
  %s3 = inlined_call_operand.hbm [shape: bf16[512,256], index: 3, kind: input, shape index: {}]
  %s4 = inlined_call_operand.vmem [shape: f32[1,256], index: 4, kind: input, shape index: {}]
  %s5 = inlined_call_operand.hbm [shape: bf16[256,128], index: 5, kind: input, shape index: {}]
  %s6 = inlined_call_operand.vmem [shape: f32[1,128], index: 6, kind: input, shape index: {}]
  %s7 = inlined_call_operand.hbm [shape: bf16[128,128], index: 7, kind: input, shape index: {}]
  %s8 = inlined_call_operand.vmem [shape: f32[1,128], index: 8, kind: input, shape index: {}]
  %s9 = inlined_call_operand.hbm [shape: f32[32,128], index: 9, kind: output, shape index: {}]
  %s10 = sld [smem:[#allocation0]]
  $region70: #{tpu_custom_call.1} parent=0
    _
  %s12 = ssub.s32 1, %s10
  %s13 = scalar_select 0, %s12, %s10
  $region1: #{tpu_custom_call.1} parent=0
    #allocation2 [shape = 'u8[57344]{0}', space=vmem, size = 0xe000, scoped, tag = 'input window, operand 0, single buffered']
    #allocation3 [shape = 's32[1]{0}', space=sflag, size = 0x4, scoped, tag = 'scoped memory for tpu_custom_call.1']
    #allocation4 [shape = 's32[1]{0}', space=sflag, size = 0x4, scoped, tag = 'scoped memory for tpu_custom_call.1']
    #allocation5 [shape = 'u8[802816]{0}', space=vmem, size = 0xc4000, scoped, tag = 'input window, operand 1, single buffered']
    #allocation6 [shape = 's32[1]{0}', space=sflag, size = 0x4, scoped, tag = 'scoped memory for tpu_custom_call.1']
    #allocation7 [shape = 'u8[2048]{0}', space=vmem, size = 0x800, scoped, tag = 'input window, operand 2, single buffered']
    #allocation8 [shape = 'u8[262144]{0}', space=vmem, size = 0x40000, scoped, tag = 'input window, operand 3, single buffered']
    #allocation9 [shape = 's32[1]{0}', space=sflag, size = 0x4, scoped, tag = 'scoped memory for tpu_custom_call.1']
    #allocation10 [shape = 'u8[65536]{0}', space=vmem, size = 0x10000, scoped, tag = 'input window, operand 5, single buffered']
    #allocation11 [shape = 'u8[32768]{0}', space=vmem, size = 0x8000, scoped, tag = 'input window, operand 7, single buffered']
    #allocation12 [shape = 's32[1]{0}', space=sflag, size = 0x4, scoped, tag = 'scoped memory for tpu_custom_call.1']
    #allocation13 [shape = 'u8[16384]{0}', space=vmem, size = 0x4000, scoped, tag = 'output window, operand 0, single buffered']
    %14 = vsyncpa [#allocation3], 0
    %15 = vsyncpa [#allocation6], 0
    %16 = vsyncpa [#allocation9], 0
    %17 = vsyncpa [#allocation12], 0
    %18 = vsyncpa [#allocation4], 0
    // Predicated region
    $region2: #{tpu_custom_call.1} parent=1 // pred_check
      _
    $region3: #{tpu_custom_call.1} parent=1 // pred_check_branch
      %20 = sbr.rel (0) target = $region5
    $region4: #{tpu_custom_call.1} parent=1 // pred_region
      %s22 = ssub.s32 1792, 1792
      %23 = vsyncadd [#allocation3], %s22
      %s24 = sshll.u32 [#allocation2], 4
      %s25 = int_to_ptr.vmem [resolvable:$true] %s24
      %30 = dma.hbm_to_vmem [thread:$0]  %s0, 1792, %s25, [#allocation3], 448, 448, 28
    $region5: #{tpu_custom_call.1} parent=1 // pred_fallthru
      _
    // Predicated region
    $region6: #{tpu_custom_call.1} parent=1 // pred_check
      _
    $region7: #{tpu_custom_call.1} parent=1 // pred_check_branch
      %32 = sbr.rel (0) target = $region9
    $region8: #{tpu_custom_call.1} parent=1 // pred_region
      %s34 = ssub.s32 25088, 25088
      %35 = vsyncadd [#allocation6], %s34
      %s36 = sshll.u32 [#allocation5], 4
      %s37 = int_to_ptr.vmem [resolvable:$true] %s36
      %42 = dma.hbm_to_vmem [thread:$0]  %s1, 25088, %s37, [#allocation6], 256, 256, 16
    $region9: #{tpu_custom_call.1} parent=1 // pred_fallthru
      _
    // Predicated region
    $region10: #{tpu_custom_call.1} parent=1 // pred_check
      _
    $region11: #{tpu_custom_call.1} parent=1 // pred_check_branch
      %44 = sbr.rel (0) target = $region13
    $region12: #{tpu_custom_call.1} parent=1 // pred_region
      %s46 = ssub.s32 64, 64
      %47 = vsyncadd [#allocation6], %s46
      %s49 = sshll.u32 [#allocation7], 4
      %s50 = int_to_ptr.vmem [resolvable:$true] %s49
      %52 = dma.hbm_to_vmem [thread:$0]  %s2, 64, %s50, [#allocation6]
    $region13: #{tpu_custom_call.1} parent=1 // pred_fallthru
      _
    // Predicated region
    $region14: #{tpu_custom_call.1} parent=1 // pred_check
      _
    $region15: #{tpu_custom_call.1} parent=1 // pred_check_branch
      %54 = sbr.rel (0) target = $region17
    $region16: #{tpu_custom_call.1} parent=1 // pred_region
      %s56 = ssub.s32 8192, 8192
      %57 = vsyncadd [#allocation9], %s56
      %s58 = sshll.u32 [#allocation8], 4
      %s59 = int_to_ptr.vmem [resolvable:$true] %s58
      %64 = dma.hbm_to_vmem [thread:$0]  %s3, 8192, %s59, [#allocation9], 128, 128, 8
    $region17: #{tpu_custom_call.1} parent=1 // pred_fallthru
      _
    // Predicated region
    $region18: #{tpu_custom_call.1} parent=1 // pred_check
      _
    $region19: #{tpu_custom_call.1} parent=1 // pred_check_branch
      %66 = sbr.rel (0) target = $region21
    $region20: #{tpu_custom_call.1} parent=1 // pred_region
      _
    $region21: #{tpu_custom_call.1} parent=1 // pred_fallthru
      _
    // Predicated region
    $region22: #{tpu_custom_call.1} parent=1 // pred_check
      _
    $region23: #{tpu_custom_call.1} parent=1 // pred_check_branch
      %68 = sbr.rel (0) target = $region25
    $region24: #{tpu_custom_call.1} parent=1 // pred_region
      %s70 = ssub.s32 2048, 2048
      %71 = vsyncadd [#allocation9], %s70
      %s72 = sshll.u32 [#allocation10], 4
      %s73 = int_to_ptr.vmem [resolvable:$true] %s72
      %78 = dma.hbm_to_vmem [thread:$0]  %s5, 2048, %s73, [#allocation9], 64, 64, 4
    $region25: #{tpu_custom_call.1} parent=1 // pred_fallthru
      _
    // Predicated region
    $region26: #{tpu_custom_call.1} parent=1 // pred_check
      _
    $region27: #{tpu_custom_call.1} parent=1 // pred_check_branch
      %80 = sbr.rel (0) target = $region29
    $region28: #{tpu_custom_call.1} parent=1 // pred_region
      _
    $region29: #{tpu_custom_call.1} parent=1 // pred_fallthru
      _
    // Predicated region
    $region30: #{tpu_custom_call.1} parent=1 // pred_check
      _
    $region31: #{tpu_custom_call.1} parent=1 // pred_check_branch
      %82 = sbr.rel (0) target = $region33
    $region32: #{tpu_custom_call.1} parent=1 // pred_region
      %s84 = ssub.s32 1024, 1024
      %85 = vsyncadd [#allocation12], %s84
      %s86 = sshll.u32 [#allocation11], 4
      %s87 = int_to_ptr.vmem [resolvable:$true] %s86
      %92 = dma.hbm_to_vmem [thread:$0]  %s7, 1024, %s87, [#allocation12], 64, 64, 4
    $region33: #{tpu_custom_call.1} parent=1 // pred_fallthru
      _
    // Predicated region
    $region34: #{tpu_custom_call.1} parent=1 // pred_check
      _
    $region35: #{tpu_custom_call.1} parent=1 // pred_check_branch
      %94 = sbr.rel (0) target = $region37
    $region36: #{tpu_custom_call.1} parent=1 // pred_region
      _
    $region37: #{tpu_custom_call.1} parent=1 // pred_fallthru
      _
    // Predicated region
    $region38: #{tpu_custom_call.1} parent=1 // pred_check
      _
    $region39: #{tpu_custom_call.1} parent=1 // pred_check_branch
      %96 = sbr.rel (0) target = $region41
    $region40: #{tpu_custom_call.1} parent=1 // pred_region
      %97 = dma.done [#allocation3], 1792
    $region41: #{tpu_custom_call.1} parent=1 // pred_fallthru
      _
    // Predicated region
    $region42: #{tpu_custom_call.1} parent=1 // pred_check
      _
    $region43: #{tpu_custom_call.1} parent=1 // pred_check_branch
      %99 = sbr.rel (0) target = $region45
    $region44: #{tpu_custom_call.1} parent=1 // pred_region
      %100 = dma.done [#allocation6], 25088
    $region45: #{tpu_custom_call.1} parent=1 // pred_fallthru
      _
    // Predicated region
    $region46: #{tpu_custom_call.1} parent=1 // pred_check
      _
    $region47: #{tpu_custom_call.1} parent=1 // pred_check_branch
      %102 = sbr.rel (0) target = $region49
    $region48: #{tpu_custom_call.1} parent=1 // pred_region
      %103 = dma.done [#allocation6], 64
    $region49: #{tpu_custom_call.1} parent=1 // pred_fallthru
      _
    // Predicated region
    $region50: #{tpu_custom_call.1} parent=1 // pred_check
      _
    $region51: #{tpu_custom_call.1} parent=1 // pred_check_branch
      %105 = sbr.rel (0) target = $region53
    $region52: #{tpu_custom_call.1} parent=1 // pred_region
      %106 = dma.done [#allocation9], 8192
    $region53: #{tpu_custom_call.1} parent=1 // pred_fallthru
      _
    // Predicated region
    $region54: #{tpu_custom_call.1} parent=1 // pred_check
      _
    $region55: #{tpu_custom_call.1} parent=1 // pred_check_branch
      %108 = sbr.rel (0) target = $region57
    $region56: #{tpu_custom_call.1} parent=1 // pred_region
      %109 = dma.done [#allocation9], 2048
    $region57: #{tpu_custom_call.1} parent=1 // pred_fallthru
      _
    // Predicated region
    $region58: #{tpu_custom_call.1} parent=1 // pred_check
      _
    $region59: #{tpu_custom_call.1} parent=1 // pred_check_branch
      %111 = sbr.rel (0) target = $region61
    $region60: #{tpu_custom_call.1} parent=1 // pred_region
      %112 = dma.done [#allocation12], 1024
    $region61: #{tpu_custom_call.1} parent=1 // pred_fallthru
      _
    %v114 = vld [vmem:[#allocation2] sm:$0xff]
    %v115 = vld [vmem:[#allocation2 + $0x8] sm:$0xff]
    %v116 = vld [vmem:[#allocation2 + $0x10] sm:$0xff]
    %v117 = vld [vmem:[#allocation2 + $0x18] sm:$0xf]
    %v118 = vld [vmem:[#allocation2 + $0x1c] sm:$0xff]
    %v119 = vld [vmem:[#allocation2 + $0x24] sm:$0xff]
    %v120 = vld [vmem:[#allocation2 + $0x2c] sm:$0xff]
    %v121 = vld [vmem:[#allocation2 + $0x34] sm:$0xf]
    %v122 = vld [vmem:[#allocation2 + $0x38] sm:$0xff]
    %v123 = vld [vmem:[#allocation2 + $0x40] sm:$0xff]
    %v124 = vld [vmem:[#allocation2 + $0x48] sm:$0xff]
    %v125 = vld [vmem:[#allocation2 + $0x50] sm:$0xf]
    %v126 = vld [vmem:[#allocation2 + $0x54] sm:$0xff]
    %v127 = vld [vmem:[#allocation2 + $0x5c] sm:$0xff]
    %v128 = vld [vmem:[#allocation2 + $0x64] sm:$0xff]
    %v129 = vld [vmem:[#allocation2 + $0x6c] sm:$0xf]
    %v130 = vld [vmem:[#allocation5] sm:$0xff]
    %v131 = vld [vmem:[#allocation5 + $0x8] sm:$0xff]
    %v132 = vld [vmem:[#allocation5 + $0x10] sm:$0xff]
    %v133 = vld [vmem:[#allocation5 + $0x18] sm:$0xff]
    %v134 = vld [vmem:[#allocation5 + $0x20] sm:$0xff]
    %v135 = vld [vmem:[#allocation5 + $0x28] sm:$0xff]
    %v136 = vld [vmem:[#allocation5 + $0x30] sm:$0xff]
    %v137 = vld [vmem:[#allocation5 + $0x38] sm:$0xff]
    %v138 = vld [vmem:[#allocation5 + $0x40] sm:$0xff]
    %v139 = vld [vmem:[#allocation5 + $0x48] sm:$0xff]
    %v140 = vld [vmem:[#allocation5 + $0x50] sm:$0xff]
    %v141 = vld [vmem:[#allocation5 + $0x58] sm:$0xff]
    %v142 = vld [vmem:[#allocation5 + $0x60] sm:$0xff]
    %v143 = vld [vmem:[#allocation5 + $0x68] sm:$0xff]
    %v144 = vld [vmem:[#allocation5 + $0x70] sm:$0xff]
    %v145 = vld [vmem:[#allocation5 + $0x78] sm:$0xff]
    %v146 = vld [vmem:[#allocation5 + $0x80] sm:$0xff]
    %v147 = vld [vmem:[#allocation5 + $0x88] sm:$0xff]
    %v148 = vld [vmem:[#allocation5 + $0x90] sm:$0xff]
    %v149 = vld [vmem:[#allocation5 + $0x98] sm:$0xff]
    %v150 = vld [vmem:[#allocation5 + $0xa0] sm:$0xff]
    %v151 = vld [vmem:[#allocation5 + $0xa8] sm:$0xff]
    %v152 = vld [vmem:[#allocation5 + $0xb0] sm:$0xff]
    %v153 = vld [vmem:[#allocation5 + $0xb8] sm:$0xff]
    %v154 = vld [vmem:[#allocation5 + $0xc0] sm:$0xff]
    %v155 = vld [vmem:[#allocation5 + $0xc8] sm:$0xff]
    %v156 = vld [vmem:[#allocation5 + $0xd0] sm:$0xff]
    %v157 = vld [vmem:[#allocation5 + $0xd8] sm:$0xff]
    %v158 = vld [vmem:[#allocation5 + $0xe0] sm:$0xff]
    %v159 = vld [vmem:[#allocation5 + $0xe8] sm:$0xff]
    %v160 = vld [vmem:[#allocation5 + $0xf0] sm:$0xff]
    %v161 = vld [vmem:[#allocation5 + $0xf8] sm:$0xff]
    %v162 = vld [vmem:[#allocation5 + $0x100] sm:$0xff]
    %v163 = vld [vmem:[#allocation5 + $0x108] sm:$0xff]
    %v164 = vld [vmem:[#allocation5 + $0x110] sm:$0xff]
    %v165 = vld [vmem:[#allocation5 + $0x118] sm:$0xff]
    %v166 = vld [vmem:[#allocation5 + $0x120] sm:$0xff]
    %v167 = vld [vmem:[#allocation5 + $0x128] sm:$0xff]
    %v168 = vld [vmem:[#allocation5 + $0x130] sm:$0xff]
    %v169 = vld [vmem:[#allocation5 + $0x138] sm:$0xff]
    %v170 = vld [vmem:[#allocation5 + $0x140] sm:$0xff]
    %v171 = vld [vmem:[#allocation5 + $0x148] sm:$0xff]
    %v172 = vld [vmem:[#allocation5 + $0x150] sm:$0xff]
    %v173 = vld [vmem:[#allocation5 + $0x158] sm:$0xff]
    %v174 = vld [vmem:[#allocation5 + $0x160] sm:$0xff]
    %v175 = vld [vmem:[#allocation5 + $0x168] sm:$0xff]
    %v176 = vld [vmem:[#allocation5 + $0x170] sm:$0xff]
    %v177 = vld [vmem:[#allocation5 + $0x178] sm:$0xff]
    %v178 = vld [vmem:[#allocation5 + $0x180] sm:$0xff]
    %v179 = vld [vmem:[#allocation5 + $0x188] sm:$0xff]
    %v180 = vld [vmem:[#allocation5 + $0x190] sm:$0xff]
    %v181 = vld [vmem:[#allocation5 + $0x198] sm:$0xff]
    %v182 = vld [vmem:[#allocation5 + $0x1a0] sm:$0xff]
    %v183 = vld [vmem:[#allocation5 + $0x1a8] sm:$0xff]
    %v184 = vld [vmem:[#allocation5 + $0x1b0] sm:$0xff]
    %v185 = vld [vmem:[#allocation5 + $0x1b8] sm:$0xff]
    %v186 = vld [vmem:[#allocation5 + $0x1c0] sm:$0xff]
    %v187 = vld [vmem:[#allocation5 + $0x1c8] sm:$0xff]
    %v188 = vld [vmem:[#allocation5 + $0x1d0] sm:$0xff]
    %v189 = vld [vmem:[#allocation5 + $0x1d8] sm:$0xff]
    %v190 = vld [vmem:[#allocation5 + $0x1e0] sm:$0xff]
    %v191 = vld [vmem:[#allocation5 + $0x1e8] sm:$0xff]
    %v192 = vld [vmem:[#allocation5 + $0x1f0] sm:$0xff]
    %v193 = vld [vmem:[#allocation5 + $0x1f8] sm:$0xff]
    %v194 = vld [vmem:[#allocation5 + $0x200] sm:$0xff]
    %v195 = vld [vmem:[#allocation5 + $0x208] sm:$0xff]
    %v196 = vld [vmem:[#allocation5 + $0x210] sm:$0xff]
    %v197 = vld [vmem:[#allocation5 + $0x218] sm:$0xff]
    %v198 = vld [vmem:[#allocation5 + $0x220] sm:$0xff]
    %v199 = vld [vmem:[#allocation5 + $0x228] sm:$0xff]
    %v200 = vld [vmem:[#allocation5 + $0x230] sm:$0xff]
    %v201 = vld [vmem:[#allocation5 + $0x238] sm:$0xff]
    %v202 = vld [vmem:[#allocation5 + $0x240] sm:$0xff]
    %v203 = vld [vmem:[#allocation5 + $0x248] sm:$0xff]
    %v204 = vld [vmem:[#allocation5 + $0x250] sm:$0xff]
    %v205 = vld [vmem:[#allocation5 + $0x258] sm:$0xff]
    %v206 = vld [vmem:[#allocation5 + $0x260] sm:$0xff]
    %v207 = vld [vmem:[#allocation5 + $0x268] sm:$0xff]
    %v208 = vld [vmem:[#allocation5 + $0x270] sm:$0xff]
    %v209 = vld [vmem:[#allocation5 + $0x278] sm:$0xff]
    %v210 = vld [vmem:[#allocation5 + $0x280] sm:$0xff]
    %v211 = vld [vmem:[#allocation5 + $0x288] sm:$0xff]
    %v212 = vld [vmem:[#allocation5 + $0x290] sm:$0xff]
    %v213 = vld [vmem:[#allocation5 + $0x298] sm:$0xff]
    %v214 = vld [vmem:[#allocation5 + $0x2a0] sm:$0xff]
    %v215 = vld [vmem:[#allocation5 + $0x2a8] sm:$0xff]
    %v216 = vld [vmem:[#allocation5 + $0x2b0] sm:$0xff]
    %v217 = vld [vmem:[#allocation5 + $0x2b8] sm:$0xff]
    %v218 = vld [vmem:[#allocation5 + $0x2c0] sm:$0xff]
    %v219 = vld [vmem:[#allocation5 + $0x2c8] sm:$0xff]
    %v220 = vld [vmem:[#allocation5 + $0x2d0] sm:$0xff]
    %v221 = vld [vmem:[#allocation5 + $0x2d8] sm:$0xff]
    %v222 = vld [vmem:[#allocation5 + $0x2e0] sm:$0xff]
    %v223 = vld [vmem:[#allocation5 + $0x2e8] sm:$0xff]
    %v224 = vld [vmem:[#allocation5 + $0x2f0] sm:$0xff]
    %v225 = vld [vmem:[#allocation5 + $0x2f8] sm:$0xff]
    %v226 = vld [vmem:[#allocation5 + $0x300] sm:$0xff]
    %v227 = vld [vmem:[#allocation5 + $0x308] sm:$0xff]
    %v228 = vld [vmem:[#allocation5 + $0x310] sm:$0xff]
    %v229 = vld [vmem:[#allocation5 + $0x318] sm:$0xff]
    %v230 = vld [vmem:[#allocation5 + $0x320] sm:$0xff]
    %v231 = vld [vmem:[#allocation5 + $0x328] sm:$0xff]
    %v232 = vld [vmem:[#allocation5 + $0x330] sm:$0xff]
    %v233 = vld [vmem:[#allocation5 + $0x338] sm:$0xff]
    %v234 = vld [vmem:[#allocation5 + $0x340] sm:$0xff]
    %v235 = vld [vmem:[#allocation5 + $0x348] sm:$0xff]
    %v236 = vld [vmem:[#allocation5 + $0x350] sm:$0xff]
    %v237 = vld [vmem:[#allocation5 + $0x358] sm:$0xff]
    %v238 = vld [vmem:[#allocation5 + $0x360] sm:$0xff]
    %v239 = vld [vmem:[#allocation5 + $0x368] sm:$0xff]
    %v240 = vld [vmem:[#allocation5 + $0x370] sm:$0xff]
    %v241 = vld [vmem:[#allocation5 + $0x378] sm:$0xff]
    %v242 = vld [vmem:[#allocation5 + $0x380] sm:$0xff]
    %v243 = vld [vmem:[#allocation5 + $0x388] sm:$0xff]
    %v244 = vld [vmem:[#allocation5 + $0x390] sm:$0xff]
    %v245 = vld [vmem:[#allocation5 + $0x398] sm:$0xff]
    %v246 = vld [vmem:[#allocation5 + $0x3a0] sm:$0xff]
    %v247 = vld [vmem:[#allocation5 + $0x3a8] sm:$0xff]
    %v248 = vld [vmem:[#allocation5 + $0x3b0] sm:$0xff]
    %v249 = vld [vmem:[#allocation5 + $0x3b8] sm:$0xff]
    %v250 = vld [vmem:[#allocation5 + $0x3c0] sm:$0xff]
    %v251 = vld [vmem:[#allocation5 + $0x3c8] sm:$0xff]
    %v252 = vld [vmem:[#allocation5 + $0x3d0] sm:$0xff]
    %v253 = vld [vmem:[#allocation5 + $0x3d8] sm:$0xff]
    %v254 = vld [vmem:[#allocation5 + $0x3e0] sm:$0xff]
    %v255 = vld [vmem:[#allocation5 + $0x3e8] sm:$0xff]
    %v256 = vld [vmem:[#allocation5 + $0x3f0] sm:$0xff]
    %v257 = vld [vmem:[#allocation5 + $0x3f8] sm:$0xff]
    %v258 = vld [vmem:[#allocation5 + $0x400] sm:$0xff]
    %v259 = vld [vmem:[#allocation5 + $0x408] sm:$0xff]
    %v260 = vld [vmem:[#allocation5 + $0x410] sm:$0xff]
    %v261 = vld [vmem:[#allocation5 + $0x418] sm:$0xff]
    %v262 = vld [vmem:[#allocation5 + $0x420] sm:$0xff]
    %v263 = vld [vmem:[#allocation5 + $0x428] sm:$0xff]
    %v264 = vld [vmem:[#allocation5 + $0x430] sm:$0xff]
    %v265 = vld [vmem:[#allocation5 + $0x438] sm:$0xff]
    %v266 = vld [vmem:[#allocation5 + $0x440] sm:$0xff]
    %v267 = vld [vmem:[#allocation5 + $0x448] sm:$0xff]
    %v268 = vld [vmem:[#allocation5 + $0x450] sm:$0xff]
    %v269 = vld [vmem:[#allocation5 + $0x458] sm:$0xff]
    %v270 = vld [vmem:[#allocation5 + $0x460] sm:$0xff]
    %v271 = vld [vmem:[#allocation5 + $0x468] sm:$0xff]
    %v272 = vld [vmem:[#allocation5 + $0x470] sm:$0xff]
    %v273 = vld [vmem:[#allocation5 + $0x478] sm:$0xff]
    %v274 = vld [vmem:[#allocation5 + $0x480] sm:$0xff]
    %v275 = vld [vmem:[#allocation5 + $0x488] sm:$0xff]
    %v276 = vld [vmem:[#allocation5 + $0x490] sm:$0xff]
    %v277 = vld [vmem:[#allocation5 + $0x498] sm:$0xff]
    %v278 = vld [vmem:[#allocation5 + $0x4a0] sm:$0xff]
    %v279 = vld [vmem:[#allocation5 + $0x4a8] sm:$0xff]
    %v280 = vld [vmem:[#allocation5 + $0x4b0] sm:$0xff]
    %v281 = vld [vmem:[#allocation5 + $0x4b8] sm:$0xff]
    %v282 = vld [vmem:[#allocation5 + $0x4c0] sm:$0xff]
    %v283 = vld [vmem:[#allocation5 + $0x4c8] sm:$0xff]
    %v284 = vld [vmem:[#allocation5 + $0x4d0] sm:$0xff]
    %v285 = vld [vmem:[#allocation5 + $0x4d8] sm:$0xff]
    %v286 = vld [vmem:[#allocation5 + $0x4e0] sm:$0xff]
    %v287 = vld [vmem:[#allocation5 + $0x4e8] sm:$0xff]
    %v288 = vld [vmem:[#allocation5 + $0x4f0] sm:$0xff]
    %v289 = vld [vmem:[#allocation5 + $0x4f8] sm:$0xff]
    %v290 = vld [vmem:[#allocation5 + $0x500] sm:$0xff]
    %v291 = vld [vmem:[#allocation5 + $0x508] sm:$0xff]
    %v292 = vld [vmem:[#allocation5 + $0x510] sm:$0xff]
    %v293 = vld [vmem:[#allocation5 + $0x518] sm:$0xff]
    %v294 = vld [vmem:[#allocation5 + $0x520] sm:$0xff]
    %v295 = vld [vmem:[#allocation5 + $0x528] sm:$0xff]
    %v296 = vld [vmem:[#allocation5 + $0x530] sm:$0xff]
    %v297 = vld [vmem:[#allocation5 + $0x538] sm:$0xff]
    %v298 = vld [vmem:[#allocation5 + $0x540] sm:$0xff]
    %v299 = vld [vmem:[#allocation5 + $0x548] sm:$0xff]
    %v300 = vld [vmem:[#allocation5 + $0x550] sm:$0xff]
    %v301 = vld [vmem:[#allocation5 + $0x558] sm:$0xff]
    %v302 = vld [vmem:[#allocation5 + $0x560] sm:$0xff]
    %v303 = vld [vmem:[#allocation5 + $0x568] sm:$0xff]
    %v304 = vld [vmem:[#allocation5 + $0x570] sm:$0xff]
    %v305 = vld [vmem:[#allocation5 + $0x578] sm:$0xff]
    %v306 = vld [vmem:[#allocation5 + $0x580] sm:$0xff]
    %v307 = vld [vmem:[#allocation5 + $0x588] sm:$0xff]
    %v308 = vld [vmem:[#allocation5 + $0x590] sm:$0xff]
    %v309 = vld [vmem:[#allocation5 + $0x598] sm:$0xff]
    %v310 = vld [vmem:[#allocation5 + $0x5a0] sm:$0xff]
    %v311 = vld [vmem:[#allocation5 + $0x5a8] sm:$0xff]
    %v312 = vld [vmem:[#allocation5 + $0x5b0] sm:$0xff]
    %v313 = vld [vmem:[#allocation5 + $0x5b8] sm:$0xff]
    %v314 = vld [vmem:[#allocation5 + $0x5c0] sm:$0xff]
    %v315 = vld [vmem:[#allocation5 + $0x5c8] sm:$0xff]
    %v316 = vld [vmem:[#allocation5 + $0x5d0] sm:$0xff]
    %v317 = vld [vmem:[#allocation5 + $0x5d8] sm:$0xff]
    %v318 = vld [vmem:[#allocation5 + $0x5e0] sm:$0xff]
    %v319 = vld [vmem:[#allocation5 + $0x5e8] sm:$0xff]
    %v320 = vld [vmem:[#allocation5 + $0x5f0] sm:$0xff]
    %v321 = vld [vmem:[#allocation5 + $0x5f8] sm:$0xff]
    %v322 = vld [vmem:[#allocation5 + $0x600] sm:$0xff]
    %v323 = vld [vmem:[#allocation5 + $0x608] sm:$0xff]
    %v324 = vld [vmem:[#allocation5 + $0x610] sm:$0xff]
    %v325 = vld [vmem:[#allocation5 + $0x618] sm:$0xff]
    %v326 = vld [vmem:[#allocation7] sm:$0xf]
    %v328 = vlaneseq
    %v329 = vshrl.u32 %v328, 7
    %v330 = vsub.s32 0, %v329
    %v331 = vrot.slane %v326, %v330
    %v332 = vlaneseq
    %v333 = vshrl.u32 %v332, 7
    %v334 = vsub.s32 1, %v333
    %v335 = vrot.slane %v326, %v334
    %v336 = vlaneseq
    %v337 = vshrl.u32 %v336, 7
    %v338 = vsub.s32 2, %v337
    %v339 = vrot.slane %v326, %v338
    %v340 = vlaneseq
    %v341 = vshrl.u32 %v340, 7
    %v342 = vsub.s32 3, %v341
    %v343 = vrot.slane %v326, %v342
    %v364 = vunpack.c.l.b16 %v114
    %v365 = vunpack.c.h.b16 %v114
    %v366 = vunpack.c.l.b16 %v115
    %v367 = vunpack.c.h.b16 %v115
    %v368 = vunpack.c.l.b16 %v116
    %v369 = vunpack.c.h.b16 %v116
    %v370 = vunpack.c.l.b16 %v117
    %v371 = vunpack.c.l.b16 %v118
    %v372 = vunpack.c.h.b16 %v118
    %v373 = vunpack.c.l.b16 %v119
    %v374 = vunpack.c.h.b16 %v119
    %v375 = vunpack.c.l.b16 %v120
    %v376 = vunpack.c.h.b16 %v120
    %v377 = vunpack.c.l.b16 %v121
    %v378 = vunpack.c.l.b16 %v122
    %v379 = vunpack.c.h.b16 %v122
    %v380 = vunpack.c.l.b16 %v123
    %v381 = vunpack.c.h.b16 %v123
    %v382 = vunpack.c.l.b16 %v124
    %v383 = vunpack.c.h.b16 %v124
    %v384 = vunpack.c.l.b16 %v125
    %v385 = vunpack.c.l.b16 %v126
    %v386 = vunpack.c.h.b16 %v126
    %v387 = vunpack.c.l.b16 %v127
    %v388 = vunpack.c.h.b16 %v127
    %v389 = vunpack.c.l.b16 %v128
    %v390 = vunpack.c.h.b16 %v128
    %v391 = vunpack.c.l.b16 %v129
    %v392 = vpack.c.b16 %v371, %v364
    %v393 = vpack.c.b16 %v372, %v365
    %v394 = vpack.c.b16 %v373, %v366
    %v395 = vpack.c.b16 %v374, %v367
    %v396 = vpack.c.b16 %v375, %v368
    %v397 = vpack.c.b16 %v376, %v369
    %v398 = vpack.c.b16 %v377, %v370
    %v399 = vpack.c.b16 %v385, %v378
    %v400 = vpack.c.b16 %v386, %v379
    %v401 = vpack.c.b16 %v387, %v380
    %v402 = vpack.c.b16 %v388, %v381
    %v403 = vpack.c.b16 %v389, %v382
    %v404 = vpack.c.b16 %v390, %v383
    %v405 = vpack.c.b16 %v391, %v384
    %v614 = vunpack.c.l.b16 %v130
    %v615 = vunpack.c.h.b16 %v130
    %v616 = vunpack.c.l.b16 %v131
    %v617 = vunpack.c.h.b16 %v131
    %v618 = vunpack.c.l.b16 %v132
    %v619 = vunpack.c.h.b16 %v132
    %v620 = vunpack.c.l.b16 %v133
    %v621 = vunpack.c.h.b16 %v133
    %v622 = vunpack.c.l.b16 %v134
    %v623 = vunpack.c.h.b16 %v134
    %v624 = vunpack.c.l.b16 %v135
    %v625 = vunpack.c.h.b16 %v135
    %v626 = vunpack.c.l.b16 %v136
    %v627 = vunpack.c.h.b16 %v136
    %v628 = vunpack.c.l.b16 %v137
    %v629 = vunpack.c.h.b16 %v137
    %v630 = vunpack.c.l.b16 %v138
    %v631 = vunpack.c.h.b16 %v138
    %v632 = vunpack.c.l.b16 %v139
    %v633 = vunpack.c.h.b16 %v139
    %v634 = vunpack.c.l.b16 %v140
    %v635 = vunpack.c.h.b16 %v140
    %v636 = vunpack.c.l.b16 %v141
    %v637 = vunpack.c.h.b16 %v141
    %v638 = vunpack.c.l.b16 %v142
    %v639 = vunpack.c.h.b16 %v142
    %v640 = vunpack.c.l.b16 %v143
    %v641 = vunpack.c.h.b16 %v143
    %v642 = vunpack.c.l.b16 %v144
    %v643 = vunpack.c.h.b16 %v144
    %v644 = vunpack.c.l.b16 %v145
    %v645 = vunpack.c.h.b16 %v145
    %v646 = vunpack.c.l.b16 %v146
    %v647 = vunpack.c.h.b16 %v146
    %v648 = vunpack.c.l.b16 %v147
    %v649 = vunpack.c.h.b16 %v147
    %v650 = vunpack.c.l.b16 %v148
    %v651 = vunpack.c.h.b16 %v148
    %v652 = vunpack.c.l.b16 %v149
    %v653 = vunpack.c.h.b16 %v149
    %v654 = vunpack.c.l.b16 %v150
    %v655 = vunpack.c.h.b16 %v150
    %v656 = vunpack.c.l.b16 %v151
    %v657 = vunpack.c.h.b16 %v151
    %v658 = vunpack.c.l.b16 %v152
    %v659 = vunpack.c.h.b16 %v152
    %v660 = vunpack.c.l.b16 %v153
    %v661 = vunpack.c.h.b16 %v153
    %v662 = vunpack.c.l.b16 %v154
    %v663 = vunpack.c.h.b16 %v154
    %v664 = vunpack.c.l.b16 %v155
    %v665 = vunpack.c.h.b16 %v155
    %v666 = vunpack.c.l.b16 %v156
    %v667 = vunpack.c.h.b16 %v156
    %v668 = vunpack.c.l.b16 %v157
    %v669 = vunpack.c.h.b16 %v157
    %v670 = vunpack.c.l.b16 %v158
    %v671 = vunpack.c.h.b16 %v158
    %v672 = vunpack.c.l.b16 %v159
    %v673 = vunpack.c.h.b16 %v159
    %v674 = vunpack.c.l.b16 %v160
    %v675 = vunpack.c.h.b16 %v160
    %v676 = vunpack.c.l.b16 %v161
    %v677 = vunpack.c.h.b16 %v161
    %v678 = vunpack.c.l.b16 %v162
    %v679 = vunpack.c.h.b16 %v162
    %v680 = vunpack.c.l.b16 %v163
    %v681 = vunpack.c.h.b16 %v163
    %v682 = vunpack.c.l.b16 %v164
    %v683 = vunpack.c.h.b16 %v164
    %v684 = vunpack.c.l.b16 %v165
    %v685 = vunpack.c.h.b16 %v165
    %v686 = vunpack.c.l.b16 %v166
    %v687 = vunpack.c.h.b16 %v166
    %v688 = vunpack.c.l.b16 %v167
    %v689 = vunpack.c.h.b16 %v167
    %v690 = vunpack.c.l.b16 %v168
    %v691 = vunpack.c.h.b16 %v168
    %v692 = vunpack.c.l.b16 %v169
    %v693 = vunpack.c.h.b16 %v169
    %v694 = vunpack.c.l.b16 %v170
    %v695 = vunpack.c.h.b16 %v170
    %v696 = vunpack.c.l.b16 %v171
    %v697 = vunpack.c.h.b16 %v171
    %v698 = vunpack.c.l.b16 %v172
    %v699 = vunpack.c.h.b16 %v172
    %v700 = vunpack.c.l.b16 %v173
    %v701 = vunpack.c.h.b16 %v173
    %v702 = vunpack.c.l.b16 %v174
    %v703 = vunpack.c.h.b16 %v174
    %v704 = vunpack.c.l.b16 %v175
    %v705 = vunpack.c.h.b16 %v175
    %v706 = vunpack.c.l.b16 %v176
    %v707 = vunpack.c.h.b16 %v176
    %v708 = vunpack.c.l.b16 %v177
    %v709 = vunpack.c.h.b16 %v177
    %v710 = vunpack.c.l.b16 %v178
    %v711 = vunpack.c.h.b16 %v178
    %v712 = vunpack.c.l.b16 %v179
    %v713 = vunpack.c.h.b16 %v179
    %v714 = vunpack.c.l.b16 %v180
    %v715 = vunpack.c.h.b16 %v180
    %v716 = vunpack.c.l.b16 %v181
    %v717 = vunpack.c.h.b16 %v181
    %v718 = vunpack.c.l.b16 %v182
    %v719 = vunpack.c.h.b16 %v182
    %v720 = vunpack.c.l.b16 %v183
    %v721 = vunpack.c.h.b16 %v183
    %v722 = vunpack.c.l.b16 %v184
    %v723 = vunpack.c.h.b16 %v184
    %v724 = vunpack.c.l.b16 %v185
    %v725 = vunpack.c.h.b16 %v185
    %v726 = vunpack.c.l.b16 %v186
    %v727 = vunpack.c.h.b16 %v186
    %v728 = vunpack.c.l.b16 %v187
    %v729 = vunpack.c.h.b16 %v187
    %v730 = vunpack.c.l.b16 %v188
    %v731 = vunpack.c.h.b16 %v188
    %v732 = vunpack.c.l.b16 %v189
    %v733 = vunpack.c.h.b16 %v189
    %v734 = vunpack.c.l.b16 %v190
    %v735 = vunpack.c.h.b16 %v190
    %v736 = vunpack.c.l.b16 %v191
    %v737 = vunpack.c.h.b16 %v191
    %v738 = vunpack.c.l.b16 %v192
    %v739 = vunpack.c.h.b16 %v192
    %v740 = vunpack.c.l.b16 %v193
    %v741 = vunpack.c.h.b16 %v193
    %v742 = vunpack.c.l.b16 %v194
    %v743 = vunpack.c.h.b16 %v194
    %v744 = vunpack.c.l.b16 %v195
    %v745 = vunpack.c.h.b16 %v195
    %v746 = vunpack.c.l.b16 %v196
    %v747 = vunpack.c.h.b16 %v196
    %v748 = vunpack.c.l.b16 %v197
    %v749 = vunpack.c.h.b16 %v197
    %v750 = vunpack.c.l.b16 %v198
    %v751 = vunpack.c.h.b16 %v198
    %v752 = vunpack.c.l.b16 %v199
    %v753 = vunpack.c.h.b16 %v199
    %v754 = vunpack.c.l.b16 %v200
    %v755 = vunpack.c.h.b16 %v200
    %v756 = vunpack.c.l.b16 %v201
    %v757 = vunpack.c.h.b16 %v201
    %v758 = vunpack.c.l.b16 %v202
    %v759 = vunpack.c.h.b16 %v202
    %v760 = vunpack.c.l.b16 %v203
    %v761 = vunpack.c.h.b16 %v203
    %v762 = vunpack.c.l.b16 %v204
    %v763 = vunpack.c.h.b16 %v204
    %v764 = vunpack.c.l.b16 %v205
    %v765 = vunpack.c.h.b16 %v205
    %v766 = vunpack.c.l.b16 %v206
    %v767 = vunpack.c.h.b16 %v206
    %v768 = vunpack.c.l.b16 %v207
    %v769 = vunpack.c.h.b16 %v207
    %v770 = vunpack.c.l.b16 %v208
    %v771 = vunpack.c.h.b16 %v208
    %v772 = vunpack.c.l.b16 %v209
    %v773 = vunpack.c.h.b16 %v209
    %v774 = vunpack.c.l.b16 %v210
    %v775 = vunpack.c.h.b16 %v210
    %v776 = vunpack.c.l.b16 %v211
    %v777 = vunpack.c.h.b16 %v211
    %v778 = vunpack.c.l.b16 %v212
    %v779 = vunpack.c.h.b16 %v212
    %v780 = vunpack.c.l.b16 %v213
    %v781 = vunpack.c.h.b16 %v213
    %v782 = vunpack.c.l.b16 %v214
    %v783 = vunpack.c.h.b16 %v214
    %v784 = vunpack.c.l.b16 %v215
    %v785 = vunpack.c.h.b16 %v215
    %v786 = vunpack.c.l.b16 %v216
    %v787 = vunpack.c.h.b16 %v216
    %v788 = vunpack.c.l.b16 %v217
    %v789 = vunpack.c.h.b16 %v217
    %v790 = vunpack.c.l.b16 %v218
    %v791 = vunpack.c.h.b16 %v218
    %v792 = vunpack.c.l.b16 %v219
    %v793 = vunpack.c.h.b16 %v219
    %v794 = vunpack.c.l.b16 %v220
    %v795 = vunpack.c.h.b16 %v220
    %v796 = vunpack.c.l.b16 %v221
    %v797 = vunpack.c.h.b16 %v221
    %v798 = vunpack.c.l.b16 %v222
    %v799 = vunpack.c.h.b16 %v222
    %v800 = vunpack.c.l.b16 %v223
    %v801 = vunpack.c.h.b16 %v223
    %v802 = vunpack.c.l.b16 %v224
    %v803 = vunpack.c.h.b16 %v224
    %v804 = vunpack.c.l.b16 %v225
    %v805 = vunpack.c.h.b16 %v225
    %v806 = vunpack.c.l.b16 %v226
    %v807 = vunpack.c.h.b16 %v226
    %v808 = vunpack.c.l.b16 %v227
    %v809 = vunpack.c.h.b16 %v227
    %v810 = vunpack.c.l.b16 %v228
    %v811 = vunpack.c.h.b16 %v228
    %v812 = vunpack.c.l.b16 %v229
    %v813 = vunpack.c.h.b16 %v229
    %v814 = vunpack.c.l.b16 %v230
    %v815 = vunpack.c.h.b16 %v230
    %v816 = vunpack.c.l.b16 %v231
    %v817 = vunpack.c.h.b16 %v231
    %v818 = vunpack.c.l.b16 %v232
    %v819 = vunpack.c.h.b16 %v232
    %v820 = vunpack.c.l.b16 %v233
    %v821 = vunpack.c.h.b16 %v233
    %v822 = vunpack.c.l.b16 %v234
    %v823 = vunpack.c.h.b16 %v234
    %v824 = vunpack.c.l.b16 %v235
    %v825 = vunpack.c.h.b16 %v235
    %v826 = vunpack.c.l.b16 %v236
    %v827 = vunpack.c.h.b16 %v236
    %v828 = vunpack.c.l.b16 %v237
    %v829 = vunpack.c.h.b16 %v237
    %v830 = vunpack.c.l.b16 %v238
    %v831 = vunpack.c.h.b16 %v238
    %v832 = vunpack.c.l.b16 %v239
    %v833 = vunpack.c.h.b16 %v239
    %v834 = vunpack.c.l.b16 %v240
    %v835 = vunpack.c.h.b16 %v240
    %v836 = vunpack.c.l.b16 %v241
    %v837 = vunpack.c.h.b16 %v241
    %v838 = vunpack.c.l.b16 %v242
    %v839 = vunpack.c.h.b16 %v242
    %v840 = vunpack.c.l.b16 %v243
    %v841 = vunpack.c.h.b16 %v243
    %v842 = vunpack.c.l.b16 %v244
    %v843 = vunpack.c.h.b16 %v244
    %v844 = vunpack.c.l.b16 %v245
    %v845 = vunpack.c.h.b16 %v245
    %v846 = vunpack.c.l.b16 %v246
    %v847 = vunpack.c.h.b16 %v246
    %v848 = vunpack.c.l.b16 %v247
    %v849 = vunpack.c.h.b16 %v247
    %v850 = vunpack.c.l.b16 %v248
    %v851 = vunpack.c.h.b16 %v248
    %v852 = vunpack.c.l.b16 %v249
    %v853 = vunpack.c.h.b16 %v249
    %v854 = vunpack.c.l.b16 %v250
    %v855 = vunpack.c.h.b16 %v250
    %v856 = vunpack.c.l.b16 %v251
    %v857 = vunpack.c.h.b16 %v251
    %v858 = vunpack.c.l.b16 %v252
    %v859 = vunpack.c.h.b16 %v252
    %v860 = vunpack.c.l.b16 %v253
    %v861 = vunpack.c.h.b16 %v253
    %v862 = vunpack.c.l.b16 %v254
    %v863 = vunpack.c.h.b16 %v254
    %v864 = vunpack.c.l.b16 %v255
    %v865 = vunpack.c.h.b16 %v255
    %v866 = vunpack.c.l.b16 %v256
    %v867 = vunpack.c.h.b16 %v256
    %v868 = vunpack.c.l.b16 %v257
    %v869 = vunpack.c.h.b16 %v257
    %v870 = vunpack.c.l.b16 %v258
    %v871 = vunpack.c.h.b16 %v258
    %v872 = vunpack.c.l.b16 %v259
    %v873 = vunpack.c.h.b16 %v259
    %v874 = vunpack.c.l.b16 %v260
    %v875 = vunpack.c.h.b16 %v260
    %v876 = vunpack.c.l.b16 %v261
    %v877 = vunpack.c.h.b16 %v261
    %v878 = vunpack.c.l.b16 %v262
    %v879 = vunpack.c.h.b16 %v262
    %v880 = vunpack.c.l.b16 %v263
    %v881 = vunpack.c.h.b16 %v263
    %v882 = vunpack.c.l.b16 %v264
    %v883 = vunpack.c.h.b16 %v264
    %v884 = vunpack.c.l.b16 %v265
    %v885 = vunpack.c.h.b16 %v265
    %v886 = vunpack.c.l.b16 %v266
    %v887 = vunpack.c.h.b16 %v266
    %v888 = vunpack.c.l.b16 %v267
    %v889 = vunpack.c.h.b16 %v267
    %v890 = vunpack.c.l.b16 %v268
    %v891 = vunpack.c.h.b16 %v268
    %v892 = vunpack.c.l.b16 %v269
    %v893 = vunpack.c.h.b16 %v269
    %v894 = vunpack.c.l.b16 %v270
    %v895 = vunpack.c.h.b16 %v270
    %v896 = vunpack.c.l.b16 %v271
    %v897 = vunpack.c.h.b16 %v271
    %v898 = vunpack.c.l.b16 %v272
    %v899 = vunpack.c.h.b16 %v272
    %v900 = vunpack.c.l.b16 %v273
    %v901 = vunpack.c.h.b16 %v273
    %v902 = vunpack.c.l.b16 %v274
    %v903 = vunpack.c.h.b16 %v274
    %v904 = vunpack.c.l.b16 %v275
    %v905 = vunpack.c.h.b16 %v275
    %v906 = vunpack.c.l.b16 %v276
    %v907 = vunpack.c.h.b16 %v276
    %v908 = vunpack.c.l.b16 %v277
    %v909 = vunpack.c.h.b16 %v277
    %v910 = vunpack.c.l.b16 %v278
    %v911 = vunpack.c.h.b16 %v278
    %v912 = vunpack.c.l.b16 %v279
    %v913 = vunpack.c.h.b16 %v279
    %v914 = vunpack.c.l.b16 %v280
    %v915 = vunpack.c.h.b16 %v280
    %v916 = vunpack.c.l.b16 %v281
    %v917 = vunpack.c.h.b16 %v281
    %v918 = vunpack.c.l.b16 %v282
    %v919 = vunpack.c.h.b16 %v282
    %v920 = vunpack.c.l.b16 %v283
    %v921 = vunpack.c.h.b16 %v283
    %v922 = vunpack.c.l.b16 %v284
    %v923 = vunpack.c.h.b16 %v284
    %v924 = vunpack.c.l.b16 %v285
    %v925 = vunpack.c.h.b16 %v285
    %v926 = vunpack.c.l.b16 %v286
    %v927 = vunpack.c.h.b16 %v286
    %v928 = vunpack.c.l.b16 %v287
    %v929 = vunpack.c.h.b16 %v287
    %v930 = vunpack.c.l.b16 %v288
    %v931 = vunpack.c.h.b16 %v288
    %v932 = vunpack.c.l.b16 %v289
    %v933 = vunpack.c.h.b16 %v289
    %v934 = vunpack.c.l.b16 %v290
    %v935 = vunpack.c.h.b16 %v290
    %v936 = vunpack.c.l.b16 %v291
    %v937 = vunpack.c.h.b16 %v291
    %v938 = vunpack.c.l.b16 %v292
    %v939 = vunpack.c.h.b16 %v292
    %v940 = vunpack.c.l.b16 %v293
    %v941 = vunpack.c.h.b16 %v293
    %v942 = vunpack.c.l.b16 %v294
    %v943 = vunpack.c.h.b16 %v294
    %v944 = vunpack.c.l.b16 %v295
    %v945 = vunpack.c.h.b16 %v295
    %v946 = vunpack.c.l.b16 %v296
    %v947 = vunpack.c.h.b16 %v296
    %v948 = vunpack.c.l.b16 %v297
    %v949 = vunpack.c.h.b16 %v297
    %v950 = vunpack.c.l.b16 %v298
    %v951 = vunpack.c.h.b16 %v298
    %v952 = vunpack.c.l.b16 %v299
    %v953 = vunpack.c.h.b16 %v299
    %v954 = vunpack.c.l.b16 %v300
    %v955 = vunpack.c.h.b16 %v300
    %v956 = vunpack.c.l.b16 %v301
    %v957 = vunpack.c.h.b16 %v301
    %v958 = vunpack.c.l.b16 %v302
    %v959 = vunpack.c.h.b16 %v302
    %v960 = vunpack.c.l.b16 %v303
    %v961 = vunpack.c.h.b16 %v303
    %v962 = vunpack.c.l.b16 %v304
    %v963 = vunpack.c.h.b16 %v304
    %v964 = vunpack.c.l.b16 %v305
    %v965 = vunpack.c.h.b16 %v305
    %v966 = vunpack.c.l.b16 %v306
    %v967 = vunpack.c.h.b16 %v306
    %v968 = vunpack.c.l.b16 %v307
    %v969 = vunpack.c.h.b16 %v307
    %v970 = vunpack.c.l.b16 %v308
    %v971 = vunpack.c.h.b16 %v308
    %v972 = vunpack.c.l.b16 %v309
    %v973 = vunpack.c.h.b16 %v309
    %v974 = vunpack.c.l.b16 %v310
    %v975 = vunpack.c.h.b16 %v310
    %v976 = vunpack.c.l.b16 %v311
    %v977 = vunpack.c.h.b16 %v311
    %v978 = vunpack.c.l.b16 %v312
    %v979 = vunpack.c.h.b16 %v312
    %v980 = vunpack.c.l.b16 %v313
    %v981 = vunpack.c.h.b16 %v313
    %v982 = vunpack.c.l.b16 %v314
    %v983 = vunpack.c.h.b16 %v314
    %v984 = vunpack.c.l.b16 %v315
    %v985 = vunpack.c.h.b16 %v315
    %v986 = vunpack.c.l.b16 %v316
    %v987 = vunpack.c.h.b16 %v316
    %v988 = vunpack.c.l.b16 %v317
    %v989 = vunpack.c.h.b16 %v317
    %v990 = vunpack.c.l.b16 %v318
    %v991 = vunpack.c.h.b16 %v318
    %v992 = vunpack.c.l.b16 %v319
    %v993 = vunpack.c.h.b16 %v319
    %v994 = vunpack.c.l.b16 %v320
    %v995 = vunpack.c.h.b16 %v320
    %v996 = vunpack.c.l.b16 %v321
    %v997 = vunpack.c.h.b16 %v321
    %v998 = vunpack.c.l.b16 %v322
    %v999 = vunpack.c.h.b16 %v322
    %v1000 = vunpack.c.l.b16 %v323
    %v1001 = vunpack.c.h.b16 %v323
    %v1002 = vunpack.c.l.b16 %v324
    %v1003 = vunpack.c.h.b16 %v324
    %v1004 = vunpack.c.l.b16 %v325
    %v1005 = vunpack.c.h.b16 %v325
    %v1006 = vpack.c.b16 %v618, %v614
    %v1007 = vpack.c.b16 %v619, %v615
    %v1008 = vpack.c.b16 %v620, %v616
    %v1009 = vpack.c.b16 %v621, %v617
    %v1010 = vpack.c.b16 %v626, %v622
    %v1011 = vpack.c.b16 %v627, %v623
    %v1012 = vpack.c.b16 %v628, %v624
    %v1013 = vpack.c.b16 %v629, %v625
    %v1014 = vpack.c.b16 %v634, %v630
    %v1015 = vpack.c.b16 %v635, %v631
    %v1016 = vpack.c.b16 %v636, %v632
    %v1017 = vpack.c.b16 %v637, %v633
    %v1018 = vpack.c.b16 %v642, %v638
    %v1019 = vpack.c.b16 %v643, %v639
    %v1020 = vpack.c.b16 %v644, %v640
    %v1021 = vpack.c.b16 %v645, %v641
    %v1022 = vpack.c.b16 %v650, %v646
    %v1023 = vpack.c.b16 %v651, %v647
    %v1024 = vpack.c.b16 %v652, %v648
    %v1025 = vpack.c.b16 %v653, %v649
    %v1026 = vpack.c.b16 %v658, %v654
    %v1027 = vpack.c.b16 %v659, %v655
    %v1028 = vpack.c.b16 %v660, %v656
    %v1029 = vpack.c.b16 %v661, %v657
    %v1030 = vpack.c.b16 %v666, %v662
    %v1031 = vpack.c.b16 %v667, %v663
    %v1032 = vpack.c.b16 %v668, %v664
    %v1033 = vpack.c.b16 %v669, %v665
    %v1034 = vpack.c.b16 %v674, %v670
    %v1035 = vpack.c.b16 %v675, %v671
    %v1036 = vpack.c.b16 %v676, %v672
    %v1037 = vpack.c.b16 %v677, %v673
    %v1038 = vpack.c.b16 %v682, %v678
    %v1039 = vpack.c.b16 %v683, %v679
    %v1040 = vpack.c.b16 %v684, %v680
    %v1041 = vpack.c.b16 %v685, %v681
    %v1042 = vpack.c.b16 %v690, %v686
    %v1043 = vpack.c.b16 %v691, %v687
    %v1044 = vpack.c.b16 %v692, %v688
    %v1045 = vpack.c.b16 %v693, %v689
    %v1046 = vpack.c.b16 %v698, %v694
    %v1047 = vpack.c.b16 %v699, %v695
    %v1048 = vpack.c.b16 %v700, %v696
    %v1049 = vpack.c.b16 %v701, %v697
    %v1050 = vpack.c.b16 %v706, %v702
    %v1051 = vpack.c.b16 %v707, %v703
    %v1052 = vpack.c.b16 %v708, %v704
    %v1053 = vpack.c.b16 %v709, %v705
    %v1054 = vpack.c.b16 %v714, %v710
    %v1055 = vpack.c.b16 %v715, %v711
    %v1056 = vpack.c.b16 %v716, %v712
    %v1057 = vpack.c.b16 %v717, %v713
    %v1058 = vpack.c.b16 %v722, %v718
    %v1059 = vpack.c.b16 %v723, %v719
    %v1060 = vpack.c.b16 %v724, %v720
    %v1061 = vpack.c.b16 %v725, %v721
    %v1062 = vpack.c.b16 %v730, %v726
    %v1063 = vpack.c.b16 %v731, %v727
    %v1064 = vpack.c.b16 %v732, %v728
    %v1065 = vpack.c.b16 %v733, %v729
    %v1066 = vpack.c.b16 %v738, %v734
    %v1067 = vpack.c.b16 %v739, %v735
    %v1068 = vpack.c.b16 %v740, %v736
    %v1069 = vpack.c.b16 %v741, %v737
    %v1070 = vpack.c.b16 %v746, %v742
    %v1071 = vpack.c.b16 %v747, %v743
    %v1072 = vpack.c.b16 %v748, %v744
    %v1073 = vpack.c.b16 %v749, %v745
    %v1074 = vpack.c.b16 %v754, %v750
    %v1075 = vpack.c.b16 %v755, %v751
    %v1076 = vpack.c.b16 %v756, %v752
    %v1077 = vpack.c.b16 %v757, %v753
    %v1078 = vpack.c.b16 %v762, %v758
    %v1079 = vpack.c.b16 %v763, %v759
    %v1080 = vpack.c.b16 %v764, %v760
    %v1081 = vpack.c.b16 %v765, %v761
    %v1082 = vpack.c.b16 %v770, %v766
    %v1083 = vpack.c.b16 %v771, %v767
    %v1084 = vpack.c.b16 %v772, %v768
    %v1085 = vpack.c.b16 %v773, %v769
    %v1086 = vpack.c.b16 %v778, %v774
    %v1087 = vpack.c.b16 %v779, %v775
    %v1088 = vpack.c.b16 %v780, %v776
    %v1089 = vpack.c.b16 %v781, %v777
    %v1090 = vpack.c.b16 %v786, %v782
    %v1091 = vpack.c.b16 %v787, %v783
    %v1092 = vpack.c.b16 %v788, %v784
    %v1093 = vpack.c.b16 %v789, %v785
    %v1094 = vpack.c.b16 %v794, %v790
    %v1095 = vpack.c.b16 %v795, %v791
    %v1096 = vpack.c.b16 %v796, %v792
    %v1097 = vpack.c.b16 %v797, %v793
    %v1098 = vpack.c.b16 %v802, %v798
    %v1099 = vpack.c.b16 %v803, %v799
    %v1100 = vpack.c.b16 %v804, %v800
    %v1101 = vpack.c.b16 %v805, %v801
    %v1102 = vpack.c.b16 %v810, %v806
    %v1103 = vpack.c.b16 %v811, %v807
    %v1104 = vpack.c.b16 %v812, %v808
    %v1105 = vpack.c.b16 %v813, %v809
    %v1106 = vpack.c.b16 %v818, %v814
    %v1107 = vpack.c.b16 %v819, %v815
    %v1108 = vpack.c.b16 %v820, %v816
    %v1109 = vpack.c.b16 %v821, %v817
    %v1110 = vpack.c.b16 %v826, %v822
    %v1111 = vpack.c.b16 %v827, %v823
    %v1112 = vpack.c.b16 %v828, %v824
    %v1113 = vpack.c.b16 %v829, %v825
    %v1114 = vpack.c.b16 %v834, %v830
    %v1115 = vpack.c.b16 %v835, %v831
    %v1116 = vpack.c.b16 %v836, %v832
    %v1117 = vpack.c.b16 %v837, %v833
    %v1118 = vpack.c.b16 %v842, %v838
    %v1119 = vpack.c.b16 %v843, %v839
    %v1120 = vpack.c.b16 %v844, %v840
    %v1121 = vpack.c.b16 %v845, %v841
    %v1122 = vpack.c.b16 %v850, %v846
    %v1123 = vpack.c.b16 %v851, %v847
    %v1124 = vpack.c.b16 %v852, %v848
    %v1125 = vpack.c.b16 %v853, %v849
    %v1126 = vpack.c.b16 %v858, %v854
    %v1127 = vpack.c.b16 %v859, %v855
    %v1128 = vpack.c.b16 %v860, %v856
    %v1129 = vpack.c.b16 %v861, %v857
    %v1130 = vpack.c.b16 %v866, %v862
    %v1131 = vpack.c.b16 %v867, %v863
    %v1132 = vpack.c.b16 %v868, %v864
    %v1133 = vpack.c.b16 %v869, %v865
    %v1134 = vpack.c.b16 %v874, %v870
    %v1135 = vpack.c.b16 %v875, %v871
    %v1136 = vpack.c.b16 %v876, %v872
    %v1137 = vpack.c.b16 %v877, %v873
    %v1138 = vpack.c.b16 %v882, %v878
    %v1139 = vpack.c.b16 %v883, %v879
    %v1140 = vpack.c.b16 %v884, %v880
    %v1141 = vpack.c.b16 %v885, %v881
    %v1142 = vpack.c.b16 %v890, %v886
    %v1143 = vpack.c.b16 %v891, %v887
    %v1144 = vpack.c.b16 %v892, %v888
    %v1145 = vpack.c.b16 %v893, %v889
    %v1146 = vpack.c.b16 %v898, %v894
    %v1147 = vpack.c.b16 %v899, %v895
    %v1148 = vpack.c.b16 %v900, %v896
    %v1149 = vpack.c.b16 %v901, %v897
    %v1150 = vpack.c.b16 %v906, %v902
    %v1151 = vpack.c.b16 %v907, %v903
    %v1152 = vpack.c.b16 %v908, %v904
    %v1153 = vpack.c.b16 %v909, %v905
    %v1154 = vpack.c.b16 %v914, %v910
    %v1155 = vpack.c.b16 %v915, %v911
    %v1156 = vpack.c.b16 %v916, %v912
    %v1157 = vpack.c.b16 %v917, %v913
    %v1158 = vpack.c.b16 %v922, %v918
    %v1159 = vpack.c.b16 %v923, %v919
    %v1160 = vpack.c.b16 %v924, %v920
    %v1161 = vpack.c.b16 %v925, %v921
    %v1162 = vpack.c.b16 %v930, %v926
    %v1163 = vpack.c.b16 %v931, %v927
    %v1164 = vpack.c.b16 %v932, %v928
    %v1165 = vpack.c.b16 %v933, %v929
    %v1166 = vpack.c.b16 %v938, %v934
    %v1167 = vpack.c.b16 %v939, %v935
    %v1168 = vpack.c.b16 %v940, %v936
    %v1169 = vpack.c.b16 %v941, %v937
    %v1170 = vpack.c.b16 %v946, %v942
    %v1171 = vpack.c.b16 %v947, %v943
    %v1172 = vpack.c.b16 %v948, %v944
    %v1173 = vpack.c.b16 %v949, %v945
    %v1174 = vpack.c.b16 %v954, %v950
    %v1175 = vpack.c.b16 %v955, %v951
    %v1176 = vpack.c.b16 %v956, %v952
    %v1177 = vpack.c.b16 %v957, %v953
    %v1178 = vpack.c.b16 %v962, %v958
    %v1179 = vpack.c.b16 %v963, %v959
    %v1180 = vpack.c.b16 %v964, %v960
    %v1181 = vpack.c.b16 %v965, %v961
    %v1182 = vpack.c.b16 %v970, %v966
    %v1183 = vpack.c.b16 %v971, %v967
    %v1184 = vpack.c.b16 %v972, %v968
    %v1185 = vpack.c.b16 %v973, %v969
    %v1186 = vpack.c.b16 %v978, %v974
    %v1187 = vpack.c.b16 %v979, %v975
    %v1188 = vpack.c.b16 %v980, %v976
    %v1189 = vpack.c.b16 %v981, %v977
    %v1190 = vpack.c.b16 %v986, %v982
    %v1191 = vpack.c.b16 %v987, %v983
    %v1192 = vpack.c.b16 %v988, %v984
    %v1193 = vpack.c.b16 %v989, %v985
    %v1194 = vpack.c.b16 %v994, %v990
    %v1195 = vpack.c.b16 %v995, %v991
    %v1196 = vpack.c.b16 %v996, %v992
    %v1197 = vpack.c.b16 %v997, %v993
    %v1198 = vpack.c.b16 %v1002, %v998
    %v1199 = vpack.c.b16 %v1003, %v999
    %v1200 = vpack.c.b16 %v1004, %v1000
    %v1201 = vpack.c.b16 %v1005, %v1001
    %vm1398 = vcmask 130048
    %v1400 = vsel %vm1398, %v398, 0
    %v1403 = vsel %vm1398, %v405, 0
    %1405 = vmatprep.subr.bf16.mxu0 %v1035
    %1406 = vmatpush1.bf16.msra.mxu0 %v1034
    %1407 = vmatprep.subr.bf16.mxu0 %v1031
    %1408 = vmatpush1.bf16.msra.mxu0 %v1030
    %1409 = vmatprep.subr.bf16.mxu0 %v1027
    %1410 = vmatpush1.bf16.msra.mxu0 %v1026
    %1411 = vmatprep.subr.bf16.mxu0 %v1023
    %1412 = vmatpush1.bf16.msra.mxu0 %v1022
    %1413 = vmatprep.subr.bf16.mxu0 %v1019
    %1414 = vmatpush1.bf16.msra.mxu0 %v1018
    %1415 = vmatprep.subr.bf16.mxu0 %v1015
    %1416 = vmatpush1.bf16.msra.mxu0 %v1014
    %1417 = vmatprep.subr.bf16.mxu0 %v1011
    %1418 = vmatpush1.bf16.msra.mxu0 %v1010
    %1419 = vmatprep.subr.bf16.mxu0 %v1007
    %1420 = vmatpush1.bf16.msra.mxu0 %v1006
    %1421 = vmatprep.subr.bf16.mxu0 %v1067
    %1422 = vmatpush2.bf16.msra.mxu0 %v1066
    %1423 = vmatprep.subr.bf16.mxu0 %v1063
    %1424 = vmatpush2.bf16.msra.mxu0 %v1062
    %1425 = vmatprep.subr.bf16.mxu0 %v1059
    %1426 = vmatpush2.bf16.msra.mxu0 %v1058
    %1427 = vmatprep.subr.bf16.mxu0 %v1055
    %1428 = vmatpush2.bf16.msra.mxu0 %v1054
    %1429 = vmatprep.subr.bf16.mxu0 %v1051
    %1430 = vmatpush2.bf16.msra.mxu0 %v1050
    %1431 = vmatprep.subr.bf16.mxu0 %v1047
    %1432 = vmatpush2.bf16.msra.mxu0 %v1046
    %1433 = vmatprep.subr.bf16.mxu0 %v1043
    %1434 = vmatpush2.bf16.msra.mxu0 %v1042
    %1435 = vmatprep.subr.bf16.mxu0 %v1039
    %1436 = vmatpush2.bf16.msra.mxu0 %v1038
    %1437 = vmatprep.mubr.bf16.mxu0 %v393
    %1438 = vmatmul.mubr.bf16.gmra.mxu0 %v392
    %v1439 = vpop.f32.mrf.mxu0
    %v1440 = vadd.f32 %v331, %v1439
    %v1441 = vpop.f32.mrf.mxu0
    %v1442 = vadd.f32 %v335, %v1441
    %v1443 = vpop.f32.mrf.mxu0
    %v1444 = vadd.f32 %v331, %v1443
    %v1445 = vpop.f32.mrf.mxu0
    %v1446 = vadd.f32 %v335, %v1445
    %1447 = vmatprep.mubr.bf16.mxu0 %v400
    %1448 = vmatmul.mubr.bf16.gmra.mxu0 %v399
    %v1449 = vpop.f32.mrf.mxu0
    %v1450 = vadd.f32 %v331, %v1449
    %v1451 = vpop.f32.mrf.mxu0
    %v1452 = vadd.f32 %v335, %v1451
    %v1453 = vpop.f32.mrf.mxu0
    %v1454 = vadd.f32 %v331, %v1453
    %v1455 = vpop.f32.mrf.mxu0
    %v1456 = vadd.f32 %v335, %v1455
    %1457 = vdwg.mxu0
    %1458 = vmatprep.subr.bf16.mxu0 %v1099
    %1459 = vmatpush1.bf16.msra.mxu0 %v1098
    %1460 = vmatprep.subr.bf16.mxu0 %v1095
    %1461 = vmatpush1.bf16.msra.mxu0 %v1094
    %1462 = vmatprep.subr.bf16.mxu0 %v1091
    %1463 = vmatpush1.bf16.msra.mxu0 %v1090
    %1464 = vmatprep.subr.bf16.mxu0 %v1087
    %1465 = vmatpush1.bf16.msra.mxu0 %v1086
    %1466 = vmatprep.subr.bf16.mxu0 %v1083
    %1467 = vmatpush1.bf16.msra.mxu0 %v1082
    %1468 = vmatprep.subr.bf16.mxu0 %v1079
    %1469 = vmatpush1.bf16.msra.mxu0 %v1078
    %1470 = vmatprep.subr.bf16.mxu0 %v1075
    %1471 = vmatpush1.bf16.msra.mxu0 %v1074
    %1472 = vmatprep.subr.bf16.mxu0 %v1071
    %1473 = vmatpush1.bf16.msra.mxu0 %v1070
    %1474 = vmatprep.subr.bf16.mxu0 %v1131
    %1475 = vmatpush2.bf16.msra.mxu0 %v1130
    %1476 = vmatprep.subr.bf16.mxu0 %v1127
    %1477 = vmatpush2.bf16.msra.mxu0 %v1126
    %1478 = vmatprep.subr.bf16.mxu0 %v1123
    %1479 = vmatpush2.bf16.msra.mxu0 %v1122
    %1480 = vmatprep.subr.bf16.mxu0 %v1119
    %1481 = vmatpush2.bf16.msra.mxu0 %v1118
    %1482 = vmatprep.subr.bf16.mxu0 %v1115
    %1483 = vmatpush2.bf16.msra.mxu0 %v1114
    %1484 = vmatprep.subr.bf16.mxu0 %v1111
    %1485 = vmatpush2.bf16.msra.mxu0 %v1110
    %1486 = vmatprep.subr.bf16.mxu0 %v1107
    %1487 = vmatpush2.bf16.msra.mxu0 %v1106
    %1488 = vmatprep.subr.bf16.mxu0 %v1103
    %1489 = vmatpush2.bf16.msra.mxu0 %v1102
    %1490 = vmatprep.mubr.bf16.mxu0 %v395
    %1491 = vmatmul.mubr.bf16.gmra.mxu0 %v394
    %v1492 = vpop.f32.mrf.mxu0
    %v1493 = vadd.f32 %v1440, %v1492
    %v1494 = vpop.f32.mrf.mxu0
    %v1495 = vadd.f32 %v1442, %v1494
    %v1496 = vpop.f32.mrf.mxu0
    %v1497 = vadd.f32 %v1444, %v1496
    %v1498 = vpop.f32.mrf.mxu0
    %v1499 = vadd.f32 %v1446, %v1498
    %1500 = vmatprep.mubr.bf16.mxu0 %v402
    %1501 = vmatmul.mubr.bf16.gmra.mxu0 %v401
    %v1502 = vpop.f32.mrf.mxu0
    %v1503 = vadd.f32 %v1450, %v1502
    %v1504 = vpop.f32.mrf.mxu0
    %v1505 = vadd.f32 %v1452, %v1504
    %v1506 = vpop.f32.mrf.mxu0
    %v1507 = vadd.f32 %v1454, %v1506
    %v1508 = vpop.f32.mrf.mxu0
    %v1509 = vadd.f32 %v1456, %v1508
    %1510 = vdwg.mxu0
    %1511 = vmatprep.subr.bf16.mxu0 %v1163
    %1512 = vmatpush1.bf16.msra.mxu0 %v1162
    %1513 = vmatprep.subr.bf16.mxu0 %v1159
    %1514 = vmatpush1.bf16.msra.mxu0 %v1158
    %1515 = vmatprep.subr.bf16.mxu0 %v1155
    %1516 = vmatpush1.bf16.msra.mxu0 %v1154
    %1517 = vmatprep.subr.bf16.mxu0 %v1151
    %1518 = vmatpush1.bf16.msra.mxu0 %v1150
    %1519 = vmatprep.subr.bf16.mxu0 %v1147
    %1520 = vmatpush1.bf16.msra.mxu0 %v1146
    %1521 = vmatprep.subr.bf16.mxu0 %v1143
    %1522 = vmatpush1.bf16.msra.mxu0 %v1142
    %1523 = vmatprep.subr.bf16.mxu0 %v1139
    %1524 = vmatpush1.bf16.msra.mxu0 %v1138
    %1525 = vmatprep.subr.bf16.mxu0 %v1135
    %1526 = vmatpush1.bf16.msra.mxu0 %v1134
    %1527 = vmatprep.subr.bf16.mxu0 %v1195
    %1528 = vmatpush2.bf16.msra.mxu0 %v1194
    %1529 = vmatprep.subr.bf16.mxu0 %v1191
    %1530 = vmatpush2.bf16.msra.mxu0 %v1190
    %1531 = vmatprep.subr.bf16.mxu0 %v1187
    %1532 = vmatpush2.bf16.msra.mxu0 %v1186
    %1533 = vmatprep.subr.bf16.mxu0 %v1183
    %1534 = vmatpush2.bf16.msra.mxu0 %v1182
    %1535 = vmatprep.subr.bf16.mxu0 %v1179
    %1536 = vmatpush2.bf16.msra.mxu0 %v1178
    %1537 = vmatprep.subr.bf16.mxu0 %v1175
    %1538 = vmatpush2.bf16.msra.mxu0 %v1174
    %1539 = vmatprep.subr.bf16.mxu0 %v1171
    %1540 = vmatpush2.bf16.msra.mxu0 %v1170
    %1541 = vmatprep.subr.bf16.mxu0 %v1167
    %1542 = vmatpush2.bf16.msra.mxu0 %v1166
    %1543 = vmatprep.mubr.bf16.mxu0 %v397
    %1544 = vmatmul.mubr.bf16.gmra.mxu0 %v396
    %v1545 = vpop.f32.mrf.mxu0
    %v1546 = vadd.f32 %v1493, %v1545
    %v1547 = vpop.f32.mrf.mxu0
    %v1548 = vadd.f32 %v1495, %v1547
    %v1549 = vpop.f32.mrf.mxu0
    %v1550 = vadd.f32 %v1497, %v1549
    %v1551 = vpop.f32.mrf.mxu0
    %v1552 = vadd.f32 %v1499, %v1551
    %1553 = vmatprep.mubr.bf16.mxu0 %v404
    %1554 = vmatmul.mubr.bf16.gmra.mxu0 %v403
    %v1555 = vpop.f32.mrf.mxu0
    %v1556 = vadd.f32 %v1503, %v1555
    %v1557 = vpop.f32.mrf.mxu0
    %v1558 = vadd.f32 %v1505, %v1557
    %v1559 = vpop.f32.mrf.mxu0
    %v1560 = vadd.f32 %v1507, %v1559
    %v1561 = vpop.f32.mrf.mxu0
    %v1562 = vadd.f32 %v1509, %v1561
    %1563 = vdwg.mxu0
    %1564 = vmatprep.subr.bf16.mxu0 0
    %1565 = vmatpush1.bf16.msra.mxu0 0
    %1566 = vmatprep.subr.bf16.mxu0 0
    %1567 = vmatpush1.bf16.msra.mxu0 0
    %1568 = vmatprep.subr.bf16.mxu0 0
    %1569 = vmatpush1.bf16.msra.mxu0 0
    %1570 = vmatprep.subr.bf16.mxu0 0
    %1571 = vmatpush1.bf16.msra.mxu0 0
    %1572 = vmatprep.subr.bf16.mxu0 0
    %1573 = vmatpush1.bf16.msra.mxu0 0
    %1574 = vmatprep.subr.bf16.mxu0 0
    %1575 = vmatpush1.bf16.msra.mxu0 0
    %1576 = vmatprep.subr.bf16.mxu0 0
    %1577 = vmatpush1.bf16.msra.mxu0 0
    %1578 = vmatprep.subr.bf16.mxu0 %v1199
    %1579 = vmatpush1.bf16.msra.mxu0 %v1198
    %1580 = vmatprep.subr.bf16.mxu0 0
    %1581 = vmatpush2.bf16.msra.mxu0 0
    %1582 = vmatprep.subr.bf16.mxu0 0
    %1583 = vmatpush2.bf16.msra.mxu0 0
    %1584 = vmatprep.subr.bf16.mxu0 0
    %1585 = vmatpush2.bf16.msra.mxu0 0
    %1586 = vmatprep.subr.bf16.mxu0 0
    %1587 = vmatpush2.bf16.msra.mxu0 0
    %1588 = vmatprep.subr.bf16.mxu0 0
    %1589 = vmatpush2.bf16.msra.mxu0 0
    %1590 = vmatprep.subr.bf16.mxu0 0
    %1591 = vmatpush2.bf16.msra.mxu0 0
    %1592 = vmatprep.subr.bf16.mxu0 0
    %1593 = vmatpush2.bf16.msra.mxu0 0
    %1594 = vmatprep.subr.bf16.mxu0 0
    %1595 = vmatpush2.bf16.msra.mxu0 0
    %1596 = vmatprep.mubr.bf16.mxu0 0
    %1597 = vmatmul.mubr.bf16.gmra.mxu0 %v1400
    %v1598 = vpop.f32.mrf.mxu0
    %v1599 = vadd.f32 %v1546, %v1598
    %v1600 = vpop.f32.mrf.mxu0
    %v1601 = vadd.f32 %v1548, %v1600
    %v1602 = vpop.f32.mrf.mxu0
    %v1603 = vadd.f32 %v1550, %v1602
    %v1604 = vpop.f32.mrf.mxu0
    %v1605 = vadd.f32 %v1552, %v1604
    %1606 = vmatprep.mubr.bf16.mxu0 0
    %1607 = vmatmul.mubr.bf16.gmra.mxu0 %v1403
    %v1608 = vpop.f32.mrf.mxu0
    %v1609 = vadd.f32 %v1556, %v1608
    %v1610 = vpop.f32.mrf.mxu0
    %v1611 = vadd.f32 %v1558, %v1610
    %v1612 = vpop.f32.mrf.mxu0
    %v1613 = vadd.f32 %v1560, %v1612
    %v1614 = vpop.f32.mrf.mxu0
    %v1615 = vadd.f32 %v1562, %v1614
    %1616 = vdwg.mxu0
    %1617 = vmatprep.subr.bf16.mxu0 %v1037
    %1618 = vmatpush1.bf16.msra.mxu0 %v1036
    %1619 = vmatprep.subr.bf16.mxu0 %v1033
    %1620 = vmatpush1.bf16.msra.mxu0 %v1032
    %1621 = vmatprep.subr.bf16.mxu0 %v1029
    %1622 = vmatpush1.bf16.msra.mxu0 %v1028
    %1623 = vmatprep.subr.bf16.mxu0 %v1025
    %1624 = vmatpush1.bf16.msra.mxu0 %v1024
    %1625 = vmatprep.subr.bf16.mxu0 %v1021
    %1626 = vmatpush1.bf16.msra.mxu0 %v1020
    %1627 = vmatprep.subr.bf16.mxu0 %v1017
    %1628 = vmatpush1.bf16.msra.mxu0 %v1016
    %1629 = vmatprep.subr.bf16.mxu0 %v1013
    %1630 = vmatpush1.bf16.msra.mxu0 %v1012
    %1631 = vmatprep.subr.bf16.mxu0 %v1009
    %1632 = vmatpush1.bf16.msra.mxu0 %v1008
    %1633 = vmatprep.subr.bf16.mxu0 %v1069
    %1634 = vmatpush2.bf16.msra.mxu0 %v1068
    %1635 = vmatprep.subr.bf16.mxu0 %v1065
    %1636 = vmatpush2.bf16.msra.mxu0 %v1064
    %1637 = vmatprep.subr.bf16.mxu0 %v1061
    %1638 = vmatpush2.bf16.msra.mxu0 %v1060
    %1639 = vmatprep.subr.bf16.mxu0 %v1057
    %1640 = vmatpush2.bf16.msra.mxu0 %v1056
    %1641 = vmatprep.subr.bf16.mxu0 %v1053
    %1642 = vmatpush2.bf16.msra.mxu0 %v1052
    %1643 = vmatprep.subr.bf16.mxu0 %v1049
    %1644 = vmatpush2.bf16.msra.mxu0 %v1048
    %1645 = vmatprep.subr.bf16.mxu0 %v1045
    %1646 = vmatpush2.bf16.msra.mxu0 %v1044
    %1647 = vmatprep.subr.bf16.mxu0 %v1041
    %1648 = vmatpush2.bf16.msra.mxu0 %v1040
    %1649 = vmatprep.mubr.bf16.mxu0 %v393
    %1650 = vmatmul.mubr.bf16.gmra.mxu0 %v392
    %v1651 = vpop.f32.mrf.mxu0
    %v1652 = vadd.f32 %v339, %v1651
    %v1653 = vpop.f32.mrf.mxu0
    %v1654 = vadd.f32 %v343, %v1653
    %v1655 = vpop.f32.mrf.mxu0
    %v1656 = vadd.f32 %v339, %v1655
    %v1657 = vpop.f32.mrf.mxu0
    %v1658 = vadd.f32 %v343, %v1657
    %1659 = vmatprep.mubr.bf16.mxu0 %v400
    %1660 = vmatmul.mubr.bf16.gmra.mxu0 %v399
    %v1661 = vpop.f32.mrf.mxu0
    %v1662 = vadd.f32 %v339, %v1661
    %v1663 = vpop.f32.mrf.mxu0
    %v1664 = vadd.f32 %v343, %v1663
    %v1665 = vpop.f32.mrf.mxu0
    %v1666 = vadd.f32 %v339, %v1665
    %v1667 = vpop.f32.mrf.mxu0
    %v1668 = vadd.f32 %v343, %v1667
    %1669 = vdwg.mxu0
    %1670 = vmatprep.subr.bf16.mxu0 %v1101
    %1671 = vmatpush1.bf16.msra.mxu0 %v1100
    %1672 = vmatprep.subr.bf16.mxu0 %v1097
    %1673 = vmatpush1.bf16.msra.mxu0 %v1096
    %1674 = vmatprep.subr.bf16.mxu0 %v1093
    %1675 = vmatpush1.bf16.msra.mxu0 %v1092
    %1676 = vmatprep.subr.bf16.mxu0 %v1089
    %1677 = vmatpush1.bf16.msra.mxu0 %v1088
    %1678 = vmatprep.subr.bf16.mxu0 %v1085
    %1679 = vmatpush1.bf16.msra.mxu0 %v1084
    %1680 = vmatprep.subr.bf16.mxu0 %v1081
    %1681 = vmatpush1.bf16.msra.mxu0 %v1080
    %1682 = vmatprep.subr.bf16.mxu0 %v1077
    %1683 = vmatpush1.bf16.msra.mxu0 %v1076
    %1684 = vmatprep.subr.bf16.mxu0 %v1073
    %1685 = vmatpush1.bf16.msra.mxu0 %v1072
    %1686 = vmatprep.subr.bf16.mxu0 %v1133
    %1687 = vmatpush2.bf16.msra.mxu0 %v1132
    %1688 = vmatprep.subr.bf16.mxu0 %v1129
    %1689 = vmatpush2.bf16.msra.mxu0 %v1128
    %1690 = vmatprep.subr.bf16.mxu0 %v1125
    %1691 = vmatpush2.bf16.msra.mxu0 %v1124
    %1692 = vmatprep.subr.bf16.mxu0 %v1121
    %1693 = vmatpush2.bf16.msra.mxu0 %v1120
    %1694 = vmatprep.subr.bf16.mxu0 %v1117
    %1695 = vmatpush2.bf16.msra.mxu0 %v1116
    %1696 = vmatprep.subr.bf16.mxu0 %v1113
    %1697 = vmatpush2.bf16.msra.mxu0 %v1112
    %1698 = vmatprep.subr.bf16.mxu0 %v1109
    %1699 = vmatpush2.bf16.msra.mxu0 %v1108
    %1700 = vmatprep.subr.bf16.mxu0 %v1105
    %1701 = vmatpush2.bf16.msra.mxu0 %v1104
    %1702 = vmatprep.mubr.bf16.mxu0 %v395
    %1703 = vmatmul.mubr.bf16.gmra.mxu0 %v394
    %v1704 = vpop.f32.mrf.mxu0
    %v1705 = vadd.f32 %v1652, %v1704
    %v1706 = vpop.f32.mrf.mxu0
    %v1707 = vadd.f32 %v1654, %v1706
    %v1708 = vpop.f32.mrf.mxu0
    %v1709 = vadd.f32 %v1656, %v1708
    %v1710 = vpop.f32.mrf.mxu0
    %v1711 = vadd.f32 %v1658, %v1710
    %1712 = vmatprep.mubr.bf16.mxu0 %v402
    %1713 = vmatmul.mubr.bf16.gmra.mxu0 %v401
    %v1714 = vpop.f32.mrf.mxu0
    %v1715 = vadd.f32 %v1662, %v1714
    %v1716 = vpop.f32.mrf.mxu0
    %v1717 = vadd.f32 %v1664, %v1716
    %v1718 = vpop.f32.mrf.mxu0
    %v1719 = vadd.f32 %v1666, %v1718
    %v1720 = vpop.f32.mrf.mxu0
    %v1721 = vadd.f32 %v1668, %v1720
    %1722 = vdwg.mxu0
    %1723 = vmatprep.subr.bf16.mxu0 %v1165
    %1724 = vmatpush1.bf16.msra.mxu0 %v1164
    %1725 = vmatprep.subr.bf16.mxu0 %v1161
    %1726 = vmatpush1.bf16.msra.mxu0 %v1160
    %1727 = vmatprep.subr.bf16.mxu0 %v1157
    %1728 = vmatpush1.bf16.msra.mxu0 %v1156
    %1729 = vmatprep.subr.bf16.mxu0 %v1153
    %1730 = vmatpush1.bf16.msra.mxu0 %v1152
    %1731 = vmatprep.subr.bf16.mxu0 %v1149
    %1732 = vmatpush1.bf16.msra.mxu0 %v1148
    %1733 = vmatprep.subr.bf16.mxu0 %v1145
    %1734 = vmatpush1.bf16.msra.mxu0 %v1144
    %1735 = vmatprep.subr.bf16.mxu0 %v1141
    %1736 = vmatpush1.bf16.msra.mxu0 %v1140
    %1737 = vmatprep.subr.bf16.mxu0 %v1137
    %1738 = vmatpush1.bf16.msra.mxu0 %v1136
    %1739 = vmatprep.subr.bf16.mxu0 %v1197
    %1740 = vmatpush2.bf16.msra.mxu0 %v1196
    %1741 = vmatprep.subr.bf16.mxu0 %v1193
    %1742 = vmatpush2.bf16.msra.mxu0 %v1192
    %1743 = vmatprep.subr.bf16.mxu0 %v1189
    %1744 = vmatpush2.bf16.msra.mxu0 %v1188
    %1745 = vmatprep.subr.bf16.mxu0 %v1185
    %1746 = vmatpush2.bf16.msra.mxu0 %v1184
    %1747 = vmatprep.subr.bf16.mxu0 %v1181
    %1748 = vmatpush2.bf16.msra.mxu0 %v1180
    %1749 = vmatprep.subr.bf16.mxu0 %v1177
    %1750 = vmatpush2.bf16.msra.mxu0 %v1176
    %1751 = vmatprep.subr.bf16.mxu0 %v1173
    %1752 = vmatpush2.bf16.msra.mxu0 %v1172
    %1753 = vmatprep.subr.bf16.mxu0 %v1169
    %1754 = vmatpush2.bf16.msra.mxu0 %v1168
    %1755 = vmatprep.mubr.bf16.mxu0 %v397
    %1756 = vmatmul.mubr.bf16.gmra.mxu0 %v396
    %v1757 = vpop.f32.mrf.mxu0
    %v1758 = vadd.f32 %v1705, %v1757
    %v1759 = vpop.f32.mrf.mxu0
    %v1760 = vadd.f32 %v1707, %v1759
    %v1761 = vpop.f32.mrf.mxu0
    %v1762 = vadd.f32 %v1709, %v1761
    %v1763 = vpop.f32.mrf.mxu0
    %v1764 = vadd.f32 %v1711, %v1763
    %1765 = vmatprep.mubr.bf16.mxu0 %v404
    %1766 = vmatmul.mubr.bf16.gmra.mxu0 %v403
    %v1767 = vpop.f32.mrf.mxu0
    %v1768 = vadd.f32 %v1715, %v1767
    %v1769 = vpop.f32.mrf.mxu0
    %v1770 = vadd.f32 %v1717, %v1769
    %v1771 = vpop.f32.mrf.mxu0
    %v1772 = vadd.f32 %v1719, %v1771
    %v1773 = vpop.f32.mrf.mxu0
    %v1774 = vadd.f32 %v1721, %v1773
    %1775 = vdwg.mxu0
    %1776 = vmatprep.subr.bf16.mxu0 0
    %1777 = vmatpush1.bf16.msra.mxu0 0
    %1778 = vmatprep.subr.bf16.mxu0 0
    %1779 = vmatpush1.bf16.msra.mxu0 0
    %1780 = vmatprep.subr.bf16.mxu0 0
    %1781 = vmatpush1.bf16.msra.mxu0 0
    %1782 = vmatprep.subr.bf16.mxu0 0
    %1783 = vmatpush1.bf16.msra.mxu0 0
    %1784 = vmatprep.subr.bf16.mxu0 0
    %1785 = vmatpush1.bf16.msra.mxu0 0
    %1786 = vmatprep.subr.bf16.mxu0 0
    %1787 = vmatpush1.bf16.msra.mxu0 0
    %1788 = vmatprep.subr.bf16.mxu0 0
    %1789 = vmatpush1.bf16.msra.mxu0 0
    %1790 = vmatprep.subr.bf16.mxu0 %v1201
    %1791 = vmatpush1.bf16.msra.mxu0 %v1200
    %1792 = vmatprep.subr.bf16.mxu0 0
    %1793 = vmatpush2.bf16.msra.mxu0 0
    %1794 = vmatprep.subr.bf16.mxu0 0
    %1795 = vmatpush2.bf16.msra.mxu0 0
    %1796 = vmatprep.subr.bf16.mxu0 0
    %1797 = vmatpush2.bf16.msra.mxu0 0
    %1798 = vmatprep.subr.bf16.mxu0 0
    %1799 = vmatpush2.bf16.msra.mxu0 0
    %1800 = vmatprep.subr.bf16.mxu0 0
    %1801 = vmatpush2.bf16.msra.mxu0 0
    %1802 = vmatprep.subr.bf16.mxu0 0
    %1803 = vmatpush2.bf16.msra.mxu0 0
    %1804 = vmatprep.subr.bf16.mxu0 0
    %1805 = vmatpush2.bf16.msra.mxu0 0
    %1806 = vmatprep.subr.bf16.mxu0 0
    %1807 = vmatpush2.bf16.msra.mxu0 0
    %1808 = vmatprep.mubr.bf16.mxu0 0
    %1809 = vmatmul.mubr.bf16.gmra.mxu0 %v1400
    %v1810 = vpop.f32.mrf.mxu0
    %v1811 = vadd.f32 %v1758, %v1810
    %v1812 = vpop.f32.mrf.mxu0
    %v1813 = vadd.f32 %v1760, %v1812
    %v1814 = vpop.f32.mrf.mxu0
    %v1815 = vadd.f32 %v1762, %v1814
    %v1816 = vpop.f32.mrf.mxu0
    %v1817 = vadd.f32 %v1764, %v1816
    %1818 = vmatprep.mubr.bf16.mxu0 0
    %1819 = vmatmul.mubr.bf16.gmra.mxu0 %v1403
    %v1820 = vpop.f32.mrf.mxu0
    %v1821 = vadd.f32 %v1768, %v1820
    %v1822 = vpop.f32.mrf.mxu0
    %v1823 = vadd.f32 %v1770, %v1822
    %v1824 = vpop.f32.mrf.mxu0
    %v1825 = vadd.f32 %v1772, %v1824
    %v1826 = vpop.f32.mrf.mxu0
    %v1827 = vadd.f32 %v1774, %v1826
    %1828 = vdwg.mxu0
    %v1829 = vmax.f32 %v1599, 0.0
    %v1830 = vmax.f32 %v1601, 0.0
    %v1831 = vmax.f32 %v1811, 0.0
    %v1832 = vmax.f32 %v1813, 0.0
    %v1833 = vmax.f32 %v1603, 0.0
    %v1834 = vmax.f32 %v1605, 0.0
    %v1835 = vmax.f32 %v1815, 0.0
    %v1836 = vmax.f32 %v1817, 0.0
    %v1837 = vmax.f32 %v1609, 0.0
    %v1838 = vmax.f32 %v1611, 0.0
    %v1839 = vmax.f32 %v1821, 0.0
    %v1840 = vmax.f32 %v1823, 0.0
    %v1841 = vmax.f32 %v1613, 0.0
    %v1842 = vmax.f32 %v1615, 0.0
    %v1843 = vmax.f32 %v1825, 0.0
    %v1844 = vmax.f32 %v1827, 0.0
    %v1845 = vpack.c.bf16 %v1833, %v1829
    %v1846 = vpack.c.bf16 %v1834, %v1830
    %v1847 = vpack.c.bf16 %v1835, %v1831
    %v1848 = vpack.c.bf16 %v1836, %v1832
    %v1849 = vpack.c.bf16 %v1841, %v1837
    %v1850 = vpack.c.bf16 %v1842, %v1838
    %v1851 = vpack.c.bf16 %v1843, %v1839
    %v1852 = vpack.c.bf16 %v1844, %v1840
    %v1853 = vld [vmem:[#allocation8] sm:$0xff]
    %v1854 = vld [vmem:[#allocation8 + $0x8] sm:$0xff]
    %v1855 = vld [vmem:[#allocation8 + $0x10] sm:$0xff]
    %v1856 = vld [vmem:[#allocation8 + $0x18] sm:$0xff]
    %v1857 = vld [vmem:[#allocation8 + $0x20] sm:$0xff]
    %v1858 = vld [vmem:[#allocation8 + $0x28] sm:$0xff]
    %v1859 = vld [vmem:[#allocation8 + $0x30] sm:$0xff]
    %v1860 = vld [vmem:[#allocation8 + $0x38] sm:$0xff]
    %v1861 = vld [vmem:[#allocation8 + $0x40] sm:$0xff]
    %v1862 = vld [vmem:[#allocation8 + $0x48] sm:$0xff]
    %v1863 = vld [vmem:[#allocation8 + $0x50] sm:$0xff]
    %v1864 = vld [vmem:[#allocation8 + $0x58] sm:$0xff]
    %v1865 = vld [vmem:[#allocation8 + $0x60] sm:$0xff]
    %v1866 = vld [vmem:[#allocation8 + $0x68] sm:$0xff]
    %v1867 = vld [vmem:[#allocation8 + $0x70] sm:$0xff]
    %v1868 = vld [vmem:[#allocation8 + $0x78] sm:$0xff]
    %v1869 = vld [vmem:[#allocation8 + $0x80] sm:$0xff]
    %v1870 = vld [vmem:[#allocation8 + $0x88] sm:$0xff]
    %v1871 = vld [vmem:[#allocation8 + $0x90] sm:$0xff]
    %v1872 = vld [vmem:[#allocation8 + $0x98] sm:$0xff]
    %v1873 = vld [vmem:[#allocation8 + $0xa0] sm:$0xff]
    %v1874 = vld [vmem:[#allocation8 + $0xa8] sm:$0xff]
    %v1875 = vld [vmem:[#allocation8 + $0xb0] sm:$0xff]
    %v1876 = vld [vmem:[#allocation8 + $0xb8] sm:$0xff]
    %v1877 = vld [vmem:[#allocation8 + $0xc0] sm:$0xff]
    %v1878 = vld [vmem:[#allocation8 + $0xc8] sm:$0xff]
    %v1879 = vld [vmem:[#allocation8 + $0xd0] sm:$0xff]
    %v1880 = vld [vmem:[#allocation8 + $0xd8] sm:$0xff]
    %v1881 = vld [vmem:[#allocation8 + $0xe0] sm:$0xff]
    %v1882 = vld [vmem:[#allocation8 + $0xe8] sm:$0xff]
    %v1883 = vld [vmem:[#allocation8 + $0xf0] sm:$0xff]
    %v1884 = vld [vmem:[#allocation8 + $0xf8] sm:$0xff]
    %v1885 = vld [vmem:[#allocation8 + $0x100] sm:$0xff]
    %v1886 = vld [vmem:[#allocation8 + $0x108] sm:$0xff]
    %v1887 = vld [vmem:[#allocation8 + $0x110] sm:$0xff]
    %v1888 = vld [vmem:[#allocation8 + $0x118] sm:$0xff]
    %v1889 = vld [vmem:[#allocation8 + $0x120] sm:$0xff]
    %v1890 = vld [vmem:[#allocation8 + $0x128] sm:$0xff]
    %v1891 = vld [vmem:[#allocation8 + $0x130] sm:$0xff]
    %v1892 = vld [vmem:[#allocation8 + $0x138] sm:$0xff]
    %v1893 = vld [vmem:[#allocation8 + $0x140] sm:$0xff]
    %v1894 = vld [vmem:[#allocation8 + $0x148] sm:$0xff]
    %v1895 = vld [vmem:[#allocation8 + $0x150] sm:$0xff]
    %v1896 = vld [vmem:[#allocation8 + $0x158] sm:$0xff]
    %v1897 = vld [vmem:[#allocation8 + $0x160] sm:$0xff]
    %v1898 = vld [vmem:[#allocation8 + $0x168] sm:$0xff]
    %v1899 = vld [vmem:[#allocation8 + $0x170] sm:$0xff]
    %v1900 = vld [vmem:[#allocation8 + $0x178] sm:$0xff]
    %v1901 = vld [vmem:[#allocation8 + $0x180] sm:$0xff]
    %v1902 = vld [vmem:[#allocation8 + $0x188] sm:$0xff]
    %v1903 = vld [vmem:[#allocation8 + $0x190] sm:$0xff]
    %v1904 = vld [vmem:[#allocation8 + $0x198] sm:$0xff]
    %v1905 = vld [vmem:[#allocation8 + $0x1a0] sm:$0xff]
    %v1906 = vld [vmem:[#allocation8 + $0x1a8] sm:$0xff]
    %v1907 = vld [vmem:[#allocation8 + $0x1b0] sm:$0xff]
    %v1908 = vld [vmem:[#allocation8 + $0x1b8] sm:$0xff]
    %v1909 = vld [vmem:[#allocation8 + $0x1c0] sm:$0xff]
    %v1910 = vld [vmem:[#allocation8 + $0x1c8] sm:$0xff]
    %v1911 = vld [vmem:[#allocation8 + $0x1d0] sm:$0xff]
    %v1912 = vld [vmem:[#allocation8 + $0x1d8] sm:$0xff]
    %v1913 = vld [vmem:[#allocation8 + $0x1e0] sm:$0xff]
    %v1914 = vld [vmem:[#allocation8 + $0x1e8] sm:$0xff]
    %v1915 = vld [vmem:[#allocation8 + $0x1f0] sm:$0xff]
    %v1916 = vld [vmem:[#allocation8 + $0x1f8] sm:$0xff]
    %v1917 = vld [vmem:[%s4] sm:$0x3]
    %v1919 = vlaneseq
    %v1920 = vshrl.u32 %v1919, 7
    %v1921 = vsub.s32 0, %v1920
    %v1922 = vrot.slane %v1917, %v1921
    %v1923 = vlaneseq
    %v1924 = vshrl.u32 %v1923, 7
    %v1925 = vsub.s32 1, %v1924
    %v1926 = vrot.slane %v1917, %v1925
    %v1993 = vunpack.c.l.b16 %v1853
    %v1994 = vunpack.c.h.b16 %v1853
    %v1995 = vunpack.c.l.b16 %v1854
    %v1996 = vunpack.c.h.b16 %v1854
    %v1997 = vunpack.c.l.b16 %v1855
    %v1998 = vunpack.c.h.b16 %v1855
    %v1999 = vunpack.c.l.b16 %v1856
    %v2000 = vunpack.c.h.b16 %v1856
    %v2001 = vunpack.c.l.b16 %v1857
    %v2002 = vunpack.c.h.b16 %v1857
    %v2003 = vunpack.c.l.b16 %v1858
    %v2004 = vunpack.c.h.b16 %v1858
    %v2005 = vunpack.c.l.b16 %v1859
    %v2006 = vunpack.c.h.b16 %v1859
    %v2007 = vunpack.c.l.b16 %v1860
    %v2008 = vunpack.c.h.b16 %v1860
    %v2009 = vunpack.c.l.b16 %v1861
    %v2010 = vunpack.c.h.b16 %v1861
    %v2011 = vunpack.c.l.b16 %v1862
    %v2012 = vunpack.c.h.b16 %v1862
    %v2013 = vunpack.c.l.b16 %v1863
    %v2014 = vunpack.c.h.b16 %v1863
    %v2015 = vunpack.c.l.b16 %v1864
    %v2016 = vunpack.c.h.b16 %v1864
    %v2017 = vunpack.c.l.b16 %v1865
    %v2018 = vunpack.c.h.b16 %v1865
    %v2019 = vunpack.c.l.b16 %v1866
    %v2020 = vunpack.c.h.b16 %v1866
    %v2021 = vunpack.c.l.b16 %v1867
    %v2022 = vunpack.c.h.b16 %v1867
    %v2023 = vunpack.c.l.b16 %v1868
    %v2024 = vunpack.c.h.b16 %v1868
    %v2025 = vunpack.c.l.b16 %v1869
    %v2026 = vunpack.c.h.b16 %v1869
    %v2027 = vunpack.c.l.b16 %v1870
    %v2028 = vunpack.c.h.b16 %v1870
    %v2029 = vunpack.c.l.b16 %v1871
    %v2030 = vunpack.c.h.b16 %v1871
    %v2031 = vunpack.c.l.b16 %v1872
    %v2032 = vunpack.c.h.b16 %v1872
    %v2033 = vunpack.c.l.b16 %v1873
    %v2034 = vunpack.c.h.b16 %v1873
    %v2035 = vunpack.c.l.b16 %v1874
    %v2036 = vunpack.c.h.b16 %v1874
    %v2037 = vunpack.c.l.b16 %v1875
    %v2038 = vunpack.c.h.b16 %v1875
    %v2039 = vunpack.c.l.b16 %v1876
    %v2040 = vunpack.c.h.b16 %v1876
    %v2041 = vunpack.c.l.b16 %v1877
    %v2042 = vunpack.c.h.b16 %v1877
    %v2043 = vunpack.c.l.b16 %v1878
    %v2044 = vunpack.c.h.b16 %v1878
    %v2045 = vunpack.c.l.b16 %v1879
    %v2046 = vunpack.c.h.b16 %v1879
    %v2047 = vunpack.c.l.b16 %v1880
    %v2048 = vunpack.c.h.b16 %v1880
    %v2049 = vunpack.c.l.b16 %v1881
    %v2050 = vunpack.c.h.b16 %v1881
    %v2051 = vunpack.c.l.b16 %v1882
    %v2052 = vunpack.c.h.b16 %v1882
    %v2053 = vunpack.c.l.b16 %v1883
    %v2054 = vunpack.c.h.b16 %v1883
    %v2055 = vunpack.c.l.b16 %v1884
    %v2056 = vunpack.c.h.b16 %v1884
    %v2057 = vunpack.c.l.b16 %v1885
    %v2058 = vunpack.c.h.b16 %v1885
    %v2059 = vunpack.c.l.b16 %v1886
    %v2060 = vunpack.c.h.b16 %v1886
    %v2061 = vunpack.c.l.b16 %v1887
    %v2062 = vunpack.c.h.b16 %v1887
    %v2063 = vunpack.c.l.b16 %v1888
    %v2064 = vunpack.c.h.b16 %v1888
    %v2065 = vunpack.c.l.b16 %v1889
    %v2066 = vunpack.c.h.b16 %v1889
    %v2067 = vunpack.c.l.b16 %v1890
    %v2068 = vunpack.c.h.b16 %v1890
    %v2069 = vunpack.c.l.b16 %v1891
    %v2070 = vunpack.c.h.b16 %v1891
    %v2071 = vunpack.c.l.b16 %v1892
    %v2072 = vunpack.c.h.b16 %v1892
    %v2073 = vunpack.c.l.b16 %v1893
    %v2074 = vunpack.c.h.b16 %v1893
    %v2075 = vunpack.c.l.b16 %v1894
    %v2076 = vunpack.c.h.b16 %v1894
    %v2077 = vunpack.c.l.b16 %v1895
    %v2078 = vunpack.c.h.b16 %v1895
    %v2079 = vunpack.c.l.b16 %v1896
    %v2080 = vunpack.c.h.b16 %v1896
    %v2081 = vunpack.c.l.b16 %v1897
    %v2082 = vunpack.c.h.b16 %v1897
    %v2083 = vunpack.c.l.b16 %v1898
    %v2084 = vunpack.c.h.b16 %v1898
    %v2085 = vunpack.c.l.b16 %v1899
    %v2086 = vunpack.c.h.b16 %v1899
    %v2087 = vunpack.c.l.b16 %v1900
    %v2088 = vunpack.c.h.b16 %v1900
    %v2089 = vunpack.c.l.b16 %v1901
    %v2090 = vunpack.c.h.b16 %v1901
    %v2091 = vunpack.c.l.b16 %v1902
    %v2092 = vunpack.c.h.b16 %v1902
    %v2093 = vunpack.c.l.b16 %v1903
    %v2094 = vunpack.c.h.b16 %v1903
    %v2095 = vunpack.c.l.b16 %v1904
    %v2096 = vunpack.c.h.b16 %v1904
    %v2097 = vunpack.c.l.b16 %v1905
    %v2098 = vunpack.c.h.b16 %v1905
    %v2099 = vunpack.c.l.b16 %v1906
    %v2100 = vunpack.c.h.b16 %v1906
    %v2101 = vunpack.c.l.b16 %v1907
    %v2102 = vunpack.c.h.b16 %v1907
    %v2103 = vunpack.c.l.b16 %v1908
    %v2104 = vunpack.c.h.b16 %v1908
    %v2105 = vunpack.c.l.b16 %v1909
    %v2106 = vunpack.c.h.b16 %v1909
    %v2107 = vunpack.c.l.b16 %v1910
    %v2108 = vunpack.c.h.b16 %v1910
    %v2109 = vunpack.c.l.b16 %v1911
    %v2110 = vunpack.c.h.b16 %v1911
    %v2111 = vunpack.c.l.b16 %v1912
    %v2112 = vunpack.c.h.b16 %v1912
    %v2113 = vunpack.c.l.b16 %v1913
    %v2114 = vunpack.c.h.b16 %v1913
    %v2115 = vunpack.c.l.b16 %v1914
    %v2116 = vunpack.c.h.b16 %v1914
    %v2117 = vunpack.c.l.b16 %v1915
    %v2118 = vunpack.c.h.b16 %v1915
    %v2119 = vunpack.c.l.b16 %v1916
    %v2120 = vunpack.c.h.b16 %v1916
    %v2121 = vpack.c.b16 %v1995, %v1993
    %v2122 = vpack.c.b16 %v1996, %v1994
    %v2123 = vpack.c.b16 %v1999, %v1997
    %v2124 = vpack.c.b16 %v2000, %v1998
    %v2125 = vpack.c.b16 %v2003, %v2001
    %v2126 = vpack.c.b16 %v2004, %v2002
    %v2127 = vpack.c.b16 %v2007, %v2005
    %v2128 = vpack.c.b16 %v2008, %v2006
    %v2129 = vpack.c.b16 %v2011, %v2009
    %v2130 = vpack.c.b16 %v2012, %v2010
    %v2131 = vpack.c.b16 %v2015, %v2013
    %v2132 = vpack.c.b16 %v2016, %v2014
    %v2133 = vpack.c.b16 %v2019, %v2017
    %v2134 = vpack.c.b16 %v2020, %v2018
    %v2135 = vpack.c.b16 %v2023, %v2021
    %v2136 = vpack.c.b16 %v2024, %v2022
    %v2137 = vpack.c.b16 %v2027, %v2025
    %v2138 = vpack.c.b16 %v2028, %v2026
    %v2139 = vpack.c.b16 %v2031, %v2029
    %v2140 = vpack.c.b16 %v2032, %v2030
    %v2141 = vpack.c.b16 %v2035, %v2033
    %v2142 = vpack.c.b16 %v2036, %v2034
    %v2143 = vpack.c.b16 %v2039, %v2037
    %v2144 = vpack.c.b16 %v2040, %v2038
    %v2145 = vpack.c.b16 %v2043, %v2041
    %v2146 = vpack.c.b16 %v2044, %v2042
    %v2147 = vpack.c.b16 %v2047, %v2045
    %v2148 = vpack.c.b16 %v2048, %v2046
    %v2149 = vpack.c.b16 %v2051, %v2049
    %v2150 = vpack.c.b16 %v2052, %v2050
    %v2151 = vpack.c.b16 %v2055, %v2053
    %v2152 = vpack.c.b16 %v2056, %v2054
    %v2153 = vpack.c.b16 %v2059, %v2057
    %v2154 = vpack.c.b16 %v2060, %v2058
    %v2155 = vpack.c.b16 %v2063, %v2061
    %v2156 = vpack.c.b16 %v2064, %v2062
    %v2157 = vpack.c.b16 %v2067, %v2065
    %v2158 = vpack.c.b16 %v2068, %v2066
    %v2159 = vpack.c.b16 %v2071, %v2069
    %v2160 = vpack.c.b16 %v2072, %v2070
    %v2161 = vpack.c.b16 %v2075, %v2073
    %v2162 = vpack.c.b16 %v2076, %v2074
    %v2163 = vpack.c.b16 %v2079, %v2077
    %v2164 = vpack.c.b16 %v2080, %v2078
    %v2165 = vpack.c.b16 %v2083, %v2081
    %v2166 = vpack.c.b16 %v2084, %v2082
    %v2167 = vpack.c.b16 %v2087, %v2085
    %v2168 = vpack.c.b16 %v2088, %v2086
    %v2169 = vpack.c.b16 %v2091, %v2089
    %v2170 = vpack.c.b16 %v2092, %v2090
    %v2171 = vpack.c.b16 %v2095, %v2093
    %v2172 = vpack.c.b16 %v2096, %v2094
    %v2173 = vpack.c.b16 %v2099, %v2097
    %v2174 = vpack.c.b16 %v2100, %v2098
    %v2175 = vpack.c.b16 %v2103, %v2101
    %v2176 = vpack.c.b16 %v2104, %v2102
    %v2177 = vpack.c.b16 %v2107, %v2105
    %v2178 = vpack.c.b16 %v2108, %v2106
    %v2179 = vpack.c.b16 %v2111, %v2109
    %v2180 = vpack.c.b16 %v2112, %v2110
    %v2181 = vpack.c.b16 %v2115, %v2113
    %v2182 = vpack.c.b16 %v2116, %v2114
    %v2183 = vpack.c.b16 %v2119, %v2117
    %v2184 = vpack.c.b16 %v2120, %v2118
    %2249 = vmatprep.subr.bf16.mxu0 %v2136
    %2250 = vmatpush1.bf16.msra.mxu0 %v2135
    %2251 = vmatprep.subr.bf16.mxu0 %v2134
    %2252 = vmatpush1.bf16.msra.mxu0 %v2133
    %2253 = vmatprep.subr.bf16.mxu0 %v2132
    %2254 = vmatpush1.bf16.msra.mxu0 %v2131
    %2255 = vmatprep.subr.bf16.mxu0 %v2130
    %2256 = vmatpush1.bf16.msra.mxu0 %v2129
    %2257 = vmatprep.subr.bf16.mxu0 %v2128
    %2258 = vmatpush1.bf16.msra.mxu0 %v2127
    %2259 = vmatprep.subr.bf16.mxu0 %v2126
    %2260 = vmatpush1.bf16.msra.mxu0 %v2125
    %2261 = vmatprep.subr.bf16.mxu0 %v2124
    %2262 = vmatpush1.bf16.msra.mxu0 %v2123
    %2263 = vmatprep.subr.bf16.mxu0 %v2122
    %2264 = vmatpush1.bf16.msra.mxu0 %v2121
    %2265 = vmatprep.subr.bf16.mxu0 %v2152
    %2266 = vmatpush2.bf16.msra.mxu0 %v2151
    %2267 = vmatprep.subr.bf16.mxu0 %v2150
    %2268 = vmatpush2.bf16.msra.mxu0 %v2149
    %2269 = vmatprep.subr.bf16.mxu0 %v2148
    %2270 = vmatpush2.bf16.msra.mxu0 %v2147
    %2271 = vmatprep.subr.bf16.mxu0 %v2146
    %2272 = vmatpush2.bf16.msra.mxu0 %v2145
    %2273 = vmatprep.subr.bf16.mxu0 %v2144
    %2274 = vmatpush2.bf16.msra.mxu0 %v2143
    %2275 = vmatprep.subr.bf16.mxu0 %v2142
    %2276 = vmatpush2.bf16.msra.mxu0 %v2141
    %2277 = vmatprep.subr.bf16.mxu0 %v2140
    %2278 = vmatpush2.bf16.msra.mxu0 %v2139
    %2279 = vmatprep.subr.bf16.mxu0 %v2138
    %2280 = vmatpush2.bf16.msra.mxu0 %v2137
    %2281 = vmatprep.mubr.bf16.mxu0 %v1846
    %2282 = vmatmul.mubr.bf16.gmra.mxu0 %v1845
    %v2283 = vpop.f32.mrf.mxu0
    %v2284 = vadd.f32 %v1922, %v2283
    %v2285 = vpop.f32.mrf.mxu0
    %v2286 = vadd.f32 %v1926, %v2285
    %v2287 = vpop.f32.mrf.mxu0
    %v2288 = vadd.f32 %v1922, %v2287
    %v2289 = vpop.f32.mrf.mxu0
    %v2290 = vadd.f32 %v1926, %v2289
    %2291 = vmatprep.mubr.bf16.mxu0 %v1850
    %2292 = vmatmul.mubr.bf16.gmra.mxu0 %v1849
    %v2293 = vpop.f32.mrf.mxu0
    %v2294 = vadd.f32 %v1922, %v2293
    %v2295 = vpop.f32.mrf.mxu0
    %v2296 = vadd.f32 %v1926, %v2295
    %v2297 = vpop.f32.mrf.mxu0
    %v2298 = vadd.f32 %v1922, %v2297
    %v2299 = vpop.f32.mrf.mxu0
    %v2300 = vadd.f32 %v1926, %v2299
    %2301 = vdwg.mxu0
    %2302 = vmatprep.subr.bf16.mxu0 %v2168
    %2303 = vmatpush1.bf16.msra.mxu0 %v2167
    %2304 = vmatprep.subr.bf16.mxu0 %v2166
    %2305 = vmatpush1.bf16.msra.mxu0 %v2165
    %2306 = vmatprep.subr.bf16.mxu0 %v2164
    %2307 = vmatpush1.bf16.msra.mxu0 %v2163
    %2308 = vmatprep.subr.bf16.mxu0 %v2162
    %2309 = vmatpush1.bf16.msra.mxu0 %v2161
    %2310 = vmatprep.subr.bf16.mxu0 %v2160
    %2311 = vmatpush1.bf16.msra.mxu0 %v2159
    %2312 = vmatprep.subr.bf16.mxu0 %v2158
    %2313 = vmatpush1.bf16.msra.mxu0 %v2157
    %2314 = vmatprep.subr.bf16.mxu0 %v2156
    %2315 = vmatpush1.bf16.msra.mxu0 %v2155
    %2316 = vmatprep.subr.bf16.mxu0 %v2154
    %2317 = vmatpush1.bf16.msra.mxu0 %v2153
    %2318 = vmatprep.subr.bf16.mxu0 %v2184
    %2319 = vmatpush2.bf16.msra.mxu0 %v2183
    %2320 = vmatprep.subr.bf16.mxu0 %v2182
    %2321 = vmatpush2.bf16.msra.mxu0 %v2181
    %2322 = vmatprep.subr.bf16.mxu0 %v2180
    %2323 = vmatpush2.bf16.msra.mxu0 %v2179
    %2324 = vmatprep.subr.bf16.mxu0 %v2178
    %2325 = vmatpush2.bf16.msra.mxu0 %v2177
    %2326 = vmatprep.subr.bf16.mxu0 %v2176
    %2327 = vmatpush2.bf16.msra.mxu0 %v2175
    %2328 = vmatprep.subr.bf16.mxu0 %v2174
    %2329 = vmatpush2.bf16.msra.mxu0 %v2173
    %2330 = vmatprep.subr.bf16.mxu0 %v2172
    %2331 = vmatpush2.bf16.msra.mxu0 %v2171
    %2332 = vmatprep.subr.bf16.mxu0 %v2170
    %2333 = vmatpush2.bf16.msra.mxu0 %v2169
    %2334 = vmatprep.mubr.bf16.mxu0 %v1848
    %2335 = vmatmul.mubr.bf16.gmra.mxu0 %v1847
    %v2336 = vpop.f32.mrf.mxu0
    %v2337 = vadd.f32 %v2284, %v2336
    %v2338 = vpop.f32.mrf.mxu0
    %v2339 = vadd.f32 %v2286, %v2338
    %v2340 = vpop.f32.mrf.mxu0
    %v2341 = vadd.f32 %v2288, %v2340
    %v2342 = vpop.f32.mrf.mxu0
    %v2343 = vadd.f32 %v2290, %v2342
    %2344 = vmatprep.mubr.bf16.mxu0 %v1852
    %2345 = vmatmul.mubr.bf16.gmra.mxu0 %v1851
    %v2346 = vpop.f32.mrf.mxu0
    %v2347 = vadd.f32 %v2294, %v2346
    %v2348 = vpop.f32.mrf.mxu0
    %v2349 = vadd.f32 %v2296, %v2348
    %v2350 = vpop.f32.mrf.mxu0
    %v2351 = vadd.f32 %v2298, %v2350
    %v2352 = vpop.f32.mrf.mxu0
    %v2353 = vadd.f32 %v2300, %v2352
    %2354 = vdwg.mxu0
    %v2355 = vmax.f32 %v2337, 0.0
    %v2356 = vmax.f32 %v2339, 0.0
    %v2357 = vmax.f32 %v2341, 0.0
    %v2358 = vmax.f32 %v2343, 0.0
    %v2359 = vmax.f32 %v2347, 0.0
    %v2360 = vmax.f32 %v2349, 0.0
    %v2361 = vmax.f32 %v2351, 0.0
    %v2362 = vmax.f32 %v2353, 0.0
    %v2363 = vpack.c.bf16 %v2357, %v2355
    %v2364 = vpack.c.bf16 %v2358, %v2356
    %v2365 = vpack.c.bf16 %v2361, %v2359
    %v2366 = vpack.c.bf16 %v2362, %v2360
    %v2367 = vld [vmem:[#allocation10] sm:$0xf]
    %v2368 = vld [vmem:[#allocation10 + $0x4] sm:$0xf]
    %v2369 = vld [vmem:[#allocation10 + $0x8] sm:$0xf]
    %v2370 = vld [vmem:[#allocation10 + $0xc] sm:$0xf]
    %v2371 = vld [vmem:[#allocation10 + $0x10] sm:$0xf]
    %v2372 = vld [vmem:[#allocation10 + $0x14] sm:$0xf]
    %v2373 = vld [vmem:[#allocation10 + $0x18] sm:$0xf]
    %v2374 = vld [vmem:[#allocation10 + $0x1c] sm:$0xf]
    %v2375 = vld [vmem:[#allocation10 + $0x20] sm:$0xf]
    %v2376 = vld [vmem:[#allocation10 + $0x24] sm:$0xf]
    %v2377 = vld [vmem:[#allocation10 + $0x28] sm:$0xf]
    %v2378 = vld [vmem:[#allocation10 + $0x2c] sm:$0xf]
    %v2379 = vld [vmem:[#allocation10 + $0x30] sm:$0xf]
    %v2380 = vld [vmem:[#allocation10 + $0x34] sm:$0xf]
    %v2381 = vld [vmem:[#allocation10 + $0x38] sm:$0xf]
    %v2382 = vld [vmem:[#allocation10 + $0x3c] sm:$0xf]
    %v2383 = vld [vmem:[#allocation10 + $0x40] sm:$0xf]
    %v2384 = vld [vmem:[#allocation10 + $0x44] sm:$0xf]
    %v2385 = vld [vmem:[#allocation10 + $0x48] sm:$0xf]
    %v2386 = vld [vmem:[#allocation10 + $0x4c] sm:$0xf]
    %v2387 = vld [vmem:[#allocation10 + $0x50] sm:$0xf]
    %v2388 = vld [vmem:[#allocation10 + $0x54] sm:$0xf]
    %v2389 = vld [vmem:[#allocation10 + $0x58] sm:$0xf]
    %v2390 = vld [vmem:[#allocation10 + $0x5c] sm:$0xf]
    %v2391 = vld [vmem:[#allocation10 + $0x60] sm:$0xf]
    %v2392 = vld [vmem:[#allocation10 + $0x64] sm:$0xf]
    %v2393 = vld [vmem:[#allocation10 + $0x68] sm:$0xf]
    %v2394 = vld [vmem:[#allocation10 + $0x6c] sm:$0xf]
    %v2395 = vld [vmem:[#allocation10 + $0x70] sm:$0xf]
    %v2396 = vld [vmem:[#allocation10 + $0x74] sm:$0xf]
    %v2397 = vld [vmem:[#allocation10 + $0x78] sm:$0xf]
    %v2398 = vld [vmem:[#allocation10 + $0x7c] sm:$0xf]
    %v2399 = vld [vmem:[%s6] sm:$0x1]
    %v2401 = vlaneseq
    %v2402 = vshrl.u32 %v2401, 7
    %v2403 = vsub.s32 0, %v2402
    %v2404 = vrot.slane %v2399, %v2403
    %v2438 = vunpack.c.l.b16 %v2367
    %v2439 = vunpack.c.l.b16 %v2368
    %v2440 = vunpack.c.l.b16 %v2369
    %v2441 = vunpack.c.l.b16 %v2370
    %v2442 = vunpack.c.l.b16 %v2371
    %v2443 = vunpack.c.l.b16 %v2372
    %v2444 = vunpack.c.l.b16 %v2373
    %v2445 = vunpack.c.l.b16 %v2374
    %v2446 = vunpack.c.l.b16 %v2375
    %v2447 = vunpack.c.l.b16 %v2376
    %v2448 = vunpack.c.l.b16 %v2377
    %v2449 = vunpack.c.l.b16 %v2378
    %v2450 = vunpack.c.l.b16 %v2379
    %v2451 = vunpack.c.l.b16 %v2380
    %v2452 = vunpack.c.l.b16 %v2381
    %v2453 = vunpack.c.l.b16 %v2382
    %v2454 = vunpack.c.l.b16 %v2383
    %v2455 = vunpack.c.l.b16 %v2384
    %v2456 = vunpack.c.l.b16 %v2385
    %v2457 = vunpack.c.l.b16 %v2386
    %v2458 = vunpack.c.l.b16 %v2387
    %v2459 = vunpack.c.l.b16 %v2388
    %v2460 = vunpack.c.l.b16 %v2389
    %v2461 = vunpack.c.l.b16 %v2390
    %v2462 = vunpack.c.l.b16 %v2391
    %v2463 = vunpack.c.l.b16 %v2392
    %v2464 = vunpack.c.l.b16 %v2393
    %v2465 = vunpack.c.l.b16 %v2394
    %v2466 = vunpack.c.l.b16 %v2395
    %v2467 = vunpack.c.l.b16 %v2396
    %v2468 = vunpack.c.l.b16 %v2397
    %v2469 = vunpack.c.l.b16 %v2398
    %v2470 = vpack.c.b16 %v2439, %v2438
    %v2471 = vpack.c.b16 %v2441, %v2440
    %v2472 = vpack.c.b16 %v2443, %v2442
    %v2473 = vpack.c.b16 %v2445, %v2444
    %v2474 = vpack.c.b16 %v2447, %v2446
    %v2475 = vpack.c.b16 %v2449, %v2448
    %v2476 = vpack.c.b16 %v2451, %v2450
    %v2477 = vpack.c.b16 %v2453, %v2452
    %v2478 = vpack.c.b16 %v2455, %v2454
    %v2479 = vpack.c.b16 %v2457, %v2456
    %v2480 = vpack.c.b16 %v2459, %v2458
    %v2481 = vpack.c.b16 %v2461, %v2460
    %v2482 = vpack.c.b16 %v2463, %v2462
    %v2483 = vpack.c.b16 %v2465, %v2464
    %v2484 = vpack.c.b16 %v2467, %v2466
    %v2485 = vpack.c.b16 %v2469, %v2468
    %2502 = vmatprep.subr.bf16.mxu0 0
    %2503 = vmatpush1.bf16.msra.mxu0 %v2477
    %2504 = vmatprep.subr.bf16.mxu0 0
    %2505 = vmatpush1.bf16.msra.mxu0 %v2476
    %2506 = vmatprep.subr.bf16.mxu0 0
    %2507 = vmatpush1.bf16.msra.mxu0 %v2475
    %2508 = vmatprep.subr.bf16.mxu0 0
    %2509 = vmatpush1.bf16.msra.mxu0 %v2474
    %2510 = vmatprep.subr.bf16.mxu0 0
    %2511 = vmatpush1.bf16.msra.mxu0 %v2473
    %2512 = vmatprep.subr.bf16.mxu0 0
    %2513 = vmatpush1.bf16.msra.mxu0 %v2472
    %2514 = vmatprep.subr.bf16.mxu0 0
    %2515 = vmatpush1.bf16.msra.mxu0 %v2471
    %2516 = vmatprep.subr.bf16.mxu0 0
    %2517 = vmatpush1.bf16.msra.mxu0 %v2470
    %2518 = vmatprep.subr.bf16.mxu0 0
    %2519 = vmatpush2.bf16.msra.mxu0 %v2485
    %2520 = vmatprep.subr.bf16.mxu0 0
    %2521 = vmatpush2.bf16.msra.mxu0 %v2484
    %2522 = vmatprep.subr.bf16.mxu0 0
    %2523 = vmatpush2.bf16.msra.mxu0 %v2483
    %2524 = vmatprep.subr.bf16.mxu0 0
    %2525 = vmatpush2.bf16.msra.mxu0 %v2482
    %2526 = vmatprep.subr.bf16.mxu0 0
    %2527 = vmatpush2.bf16.msra.mxu0 %v2481
    %2528 = vmatprep.subr.bf16.mxu0 0
    %2529 = vmatpush2.bf16.msra.mxu0 %v2480
    %2530 = vmatprep.subr.bf16.mxu0 0
    %2531 = vmatpush2.bf16.msra.mxu0 %v2479
    %2532 = vmatprep.subr.bf16.mxu0 0
    %2533 = vmatpush2.bf16.msra.mxu0 %v2478
    %2534 = vmatprep.mubr.bf16.mxu0 %v2364
    %2535 = vmatmul.mubr.bf16.gmra.mxu0 %v2363
    %v2536 = vpop.f32.mrf.mxu0
    %v2537 = vadd.f32 %v2404, %v2536
    %v2538 = vpop.f32.mrf.mxu0
    %v2539 = vpop.f32.mrf.mxu0
    %v2540 = vadd.f32 %v2404, %v2539
    %v2541 = vpop.f32.mrf.mxu0
    %2542 = vmatprep.mubr.bf16.mxu0 %v2366
    %2543 = vmatmul.mubr.bf16.gmra.mxu0 %v2365
    %v2544 = vpop.f32.mrf.mxu0
    %v2545 = vadd.f32 %v2404, %v2544
    %v2546 = vpop.f32.mrf.mxu0
    %v2547 = vpop.f32.mrf.mxu0
    %v2548 = vadd.f32 %v2404, %v2547
    %v2549 = vpop.f32.mrf.mxu0
    %2550 = vdwg.mxu0
    %v2551 = vmax.f32 %v2537, 0.0
    %v2552 = vmax.f32 %v2540, 0.0
    %v2553 = vmax.f32 %v2545, 0.0
    %v2554 = vmax.f32 %v2548, 0.0
    %v2555 = vpack.c.bf16 %v2552, %v2551
    %v2556 = vpack.c.bf16 %v2554, %v2553
    %v2557 = vld [vmem:[#allocation11] sm:$0xf]
    %v2558 = vld [vmem:[#allocation11 + $0x4] sm:$0xf]
    %v2559 = vld [vmem:[#allocation11 + $0x8] sm:$0xf]
    %v2560 = vld [vmem:[#allocation11 + $0xc] sm:$0xf]
    %v2561 = vld [vmem:[#allocation11 + $0x10] sm:$0xf]
    %v2562 = vld [vmem:[#allocation11 + $0x14] sm:$0xf]
    %v2563 = vld [vmem:[#allocation11 + $0x18] sm:$0xf]
    %v2564 = vld [vmem:[#allocation11 + $0x1c] sm:$0xf]
    %v2565 = vld [vmem:[#allocation11 + $0x20] sm:$0xf]
    %v2566 = vld [vmem:[#allocation11 + $0x24] sm:$0xf]
    %v2567 = vld [vmem:[#allocation11 + $0x28] sm:$0xf]
    %v2568 = vld [vmem:[#allocation11 + $0x2c] sm:$0xf]
    %v2569 = vld [vmem:[#allocation11 + $0x30] sm:$0xf]
    %v2570 = vld [vmem:[#allocation11 + $0x34] sm:$0xf]
    %v2571 = vld [vmem:[#allocation11 + $0x38] sm:$0xf]
    %v2572 = vld [vmem:[#allocation11 + $0x3c] sm:$0xf]
    %v2573 = vld [vmem:[%s8] sm:$0x1]
    %v2575 = vlaneseq
    %v2576 = vshrl.u32 %v2575, 7
    %v2577 = vsub.s32 0, %v2576
    %v2578 = vrot.slane %v2573, %v2577
    %v2596 = vunpack.c.l.b16 %v2557
    %v2597 = vunpack.c.l.b16 %v2558
    %v2598 = vunpack.c.l.b16 %v2559
    %v2599 = vunpack.c.l.b16 %v2560
    %v2600 = vunpack.c.l.b16 %v2561
    %v2601 = vunpack.c.l.b16 %v2562
    %v2602 = vunpack.c.l.b16 %v2563
    %v2603 = vunpack.c.l.b16 %v2564
    %v2604 = vunpack.c.l.b16 %v2565
    %v2605 = vunpack.c.l.b16 %v2566
    %v2606 = vunpack.c.l.b16 %v2567
    %v2607 = vunpack.c.l.b16 %v2568
    %v2608 = vunpack.c.l.b16 %v2569
    %v2609 = vunpack.c.l.b16 %v2570
    %v2610 = vunpack.c.l.b16 %v2571
    %v2611 = vunpack.c.l.b16 %v2572
    %v2612 = vpack.c.b16 %v2597, %v2596
    %v2613 = vpack.c.b16 %v2599, %v2598
    %v2614 = vpack.c.b16 %v2601, %v2600
    %v2615 = vpack.c.b16 %v2603, %v2602
    %v2616 = vpack.c.b16 %v2605, %v2604
    %v2617 = vpack.c.b16 %v2607, %v2606
    %v2618 = vpack.c.b16 %v2609, %v2608
    %v2619 = vpack.c.b16 %v2611, %v2610
    %2628 = vmatprep.subr.bf16.mxu0 0
    %2629 = vmatpush1.bf16.msra.mxu0 %v2619
    %2630 = vmatprep.subr.bf16.mxu0 0
    %2631 = vmatpush1.bf16.msra.mxu0 %v2618
    %2632 = vmatprep.subr.bf16.mxu0 0
    %2633 = vmatpush1.bf16.msra.mxu0 %v2617
    %2634 = vmatprep.subr.bf16.mxu0 0
    %2635 = vmatpush1.bf16.msra.mxu0 %v2616
    %2636 = vmatprep.subr.bf16.mxu0 0
    %2637 = vmatpush1.bf16.msra.mxu0 %v2615
    %2638 = vmatprep.subr.bf16.mxu0 0
    %2639 = vmatpush1.bf16.msra.mxu0 %v2614
    %2640 = vmatprep.subr.bf16.mxu0 0
    %2641 = vmatpush1.bf16.msra.mxu0 %v2613
    %2642 = vmatprep.subr.bf16.mxu0 0
    %2643 = vmatpush1.bf16.msra.mxu0 %v2612
    %2644 = vmatprep.subr.bf16.mxu0 0
    %2645 = vmatpush2.bf16.msra.mxu0 0
    %2646 = vmatprep.subr.bf16.mxu0 0
    %2647 = vmatpush2.bf16.msra.mxu0 0
    %2648 = vmatprep.subr.bf16.mxu0 0
    %2649 = vmatpush2.bf16.msra.mxu0 0
    %2650 = vmatprep.subr.bf16.mxu0 0
    %2651 = vmatpush2.bf16.msra.mxu0 0
    %2652 = vmatprep.subr.bf16.mxu0 0
    %2653 = vmatpush2.bf16.msra.mxu0 0
    %2654 = vmatprep.subr.bf16.mxu0 0
    %2655 = vmatpush2.bf16.msra.mxu0 0
    %2656 = vmatprep.subr.bf16.mxu0 0
    %2657 = vmatpush2.bf16.msra.mxu0 0
    %2658 = vmatprep.subr.bf16.mxu0 0
    %2659 = vmatpush2.bf16.msra.mxu0 0
    %2660 = vmatprep.mubr.bf16.mxu0 0
    %2661 = vmatmul.mubr.bf16.gmra.mxu0 %v2555
    %v2662 = vpop.f32.mrf.mxu0
    %v2663 = vadd.f32 %v2578, %v2662
    %v2664 = vpop.f32.mrf.mxu0
    %v2665 = vpop.f32.mrf.mxu0
    %v2666 = vadd.f32 %v2578, %v2665
    %v2667 = vpop.f32.mrf.mxu0
    %2668 = vmatprep.mubr.bf16.mxu0 0
    %2669 = vmatmul.mubr.bf16.gmra.mxu0 %v2556
    %v2670 = vpop.f32.mrf.mxu0
    %v2671 = vadd.f32 %v2578, %v2670
    %v2672 = vpop.f32.mrf.mxu0
    %v2673 = vpop.f32.mrf.mxu0
    %v2674 = vadd.f32 %v2578, %v2673
    %v2675 = vpop.f32.mrf.mxu0
    %2676 = vdwg.mxu0
    %2677 = vmax.xlane.f32.xlu0 %v2663
    %v2678 = vpop.xlane.xlu0 %2677
    %2679 = vmax.xlane.f32.xlu0 %v2666
    %v2680 = vpop.xlane.xlu0 %2679
    %2681 = vmax.xlane.f32.xlu0 %v2671
    %v2682 = vpop.xlane.xlu0 %2681
    %2683 = vmax.xlane.f32.xlu0 %v2674
    %v2684 = vpop.xlane.xlu0 %2683
    %v2685 = vsub.f32 %v2663, %v2678
    %v2686 = vsub.f32 %v2666, %v2680
    %v2687 = vsub.f32 %v2671, %v2682
    %v2688 = vsub.f32 %v2674, %v2684
    %v2689 = vmul.f32 %v2685, 1.442695
    %v2690 = vpow.pop %v2689
    %v2691 = vmul.f32 %v2686, 1.442695
    %v2692 = vpow.pop %v2691
    %v2693 = vmul.f32 %v2687, 1.442695
    %v2694 = vpow.pop %v2693
    %v2695 = vmul.f32 %v2688, 1.442695
    %v2696 = vpow.pop %v2695
    %2697 = vadd.xlane.f32.xlu0 %v2690
    %v2698 = vpop.xlane.xlu0 %2697
    %2699 = vadd.xlane.f32.xlu0 %v2692
    %v2700 = vpop.xlane.xlu0 %2699
    %2701 = vadd.xlane.f32.xlu0 %v2694
    %v2702 = vpop.xlane.xlu0 %2701
    %2703 = vadd.xlane.f32.xlu0 %v2696
    %v2704 = vpop.xlane.xlu0 %2703
    %v2705 = vlog2.pop %v2698
    %v2706 = vmul.f32 %v2705, 0.6931472
    %v2707 = vlog2.pop %v2700
    %v2708 = vmul.f32 %v2707, 0.6931472
    %v2709 = vlog2.pop %v2702
    %v2710 = vmul.f32 %v2709, 0.6931472
    %v2711 = vlog2.pop %v2704
    %v2712 = vmul.f32 %v2711, 0.6931472
    %v2713 = vsub.f32 %v2685, %v2706
    %v2714 = vsub.f32 %v2686, %v2708
    %v2715 = vsub.f32 %v2687, %v2710
    %v2716 = vsub.f32 %v2688, %v2712
    %2717 = vst [vmem:[#allocation13] sm:$0xff] %v2713
    %2718 = vst [vmem:[#allocation13 + $0x8] sm:$0xff] %v2714
    %2719 = vst [vmem:[#allocation13 + $0x10] sm:$0xff] %v2715
    %2720 = vst [vmem:[#allocation13 + $0x18] sm:$0xff] %v2716
    // Predicated region
    $region62: #{tpu_custom_call.1} parent=1 // pred_check
      _
    $region63: #{tpu_custom_call.1} parent=1 // pred_check_branch
      %2722 = sbr.rel (0) target = $region65
    $region64: #{tpu_custom_call.1} parent=1 // pred_region
      %s2724 = ssub.s32 512, 512
      %2725 = vsyncadd [#allocation4], %s2724
      %s2726 = sshll.u32 [#allocation13], 4
      %s2727 = int_to_ptr.vmem [resolvable:$true] %s2726
      %2732 = dma.vmem_to_hbm [thread:$0]  %s2727, 512, %s9, [#allocation4], 128, 128, 8
    $region65: #{tpu_custom_call.1} parent=1 // pred_fallthru
      _
    // Predicated region
    $region66: #{tpu_custom_call.1} parent=1 // pred_check
      _
    $region67: #{tpu_custom_call.1} parent=1 // pred_check_branch
      %2734 = sbr.rel (0) target = $region69
    $region68: #{tpu_custom_call.1} parent=1 // pred_region
      %2735 = dma.done [#allocation4], 512
    $region69: #{tpu_custom_call.1} parent=1 // pred_fallthru
      _
    %2736 = vsyncpa [#allocation3], 1
    %2737 = vsyncpa [#allocation6], 1
    %2738 = vsyncpa [#allocation9], 1
    %2739 = vsyncpa [#allocation12], 1
    %2740 = vsyncpa [#allocation4], 1

</llo_original>
